<compile_context>
chip_gen: v5e
topology: v5e:2x2
jax: 0.10.0
libtpu: 0.0.40
codegen_flags: <defaults>
</compile_context>

<pallas_src>
import functools

import jax
import jax.numpy as jnp
from jax.experimental import pallas as pl
from jax.experimental.pallas import tpu as pltpu


def residual_block_kernel(x_ref, w1_ref, w2_ref, o_ref, *, width,
                          matmul_dtype):
    # x_ref / o_ref : (1, C, H*W)     lane-flat activations
    # w*_ref        : (9, Cout, Cin)  per-tap weights, tap = ky*3 + kx
    HW = x_ref.shape[2]
    W = width
    eps = 1e-5

    # Boundary masks over the flat H*W lane axis (shared by both convs).
    lane = jax.lax.broadcasted_iota(jnp.int32, (1, HW), 1)
    col = lane % W
    top = lane < W                    # h == 0
    bottom = lane >= HW - W           # h == H-1
    left = col == 0                   # w == 0
    right = col == W - 1              # w == W-1

    def conv3x3_refl(t, w_ref):
        # 3x3 conv with ReflectionPad2d(1) on a lane-flat (C, H*W) tensor.
        # Shifted taps use circular pltpu.roll along the flat axis plus
        # jnp.where fixups at the image border (reflection).  Row and column
        # reflections are independent, so composing them is exact.
        up = pltpu.roll(t, W, axis=1)           # value at p - W  (h-1)
        down = pltpu.roll(t, HW - W, axis=1)    # value at p + W  (h+1)
        rows = (jnp.where(top, down, up),       # dy = -1
                t,                              # dy =  0
                jnp.where(bottom, up, down))    # dy = +1
        acc = jnp.zeros((w_ref.shape[1], HW), jnp.float32)
        for ky in range(3):
            r = rows[ky]
            lft = pltpu.roll(r, 1, axis=1)          # value at p - 1  (w-1)
            rgt = pltpu.roll(r, HW - 1, axis=1)     # value at p + 1  (w+1)
            cols = (jnp.where(left, rgt, lft),      # dx = -1
                    r,                              # dx =  0
                    jnp.where(right, lft, rgt))     # dx = +1
            for kx in range(3):
                acc = acc + jnp.dot(
                    w_ref[ky * 3 + kx],
                    cols[kx].astype(matmul_dtype),
                    preferred_element_type=jnp.float32)
        return acc

    def instance_norm(t):
        # Per-channel over H*W lanes; biased variance, no affine (PyTorch
        # InstanceNorm2d defaults).  Two-pass centered form for accuracy.
        mean = jnp.mean(t, axis=1, keepdims=True)
        centered = t - mean
        var = jnp.mean(centered * centered, axis=1, keepdims=True)
        return centered * jax.lax.rsqrt(var + eps)

    x = x_ref[0].astype(jnp.float32)                       # (C, HW)
    y = jnp.maximum(instance_norm(conv3x3_refl(x, w1_ref)), 0.0)
    z = instance_norm(conv3x3_refl(y, w2_ref))
    o_ref[0] = (x + z).astype(o_ref.dtype)


def residual_block(x, w1, b1, w2, b2, *, matmul_dtype=jnp.float32):
    """ResidualBlock forward.

    b1/b2 are accepted for API parity with the PyTorch module but never sent
    to the kernel: both convs feed affine-free InstanceNorm, which removes
    any per-channel constant, so the biases cancel exactly.
    """
    del b1, b2
    N, C, H, W = x.shape
    HW = H * W

    # Lane-dense activation layout (HW multiple of 128 -> unmasked vst).
    x_flat = x.reshape(N, C, HW)

    # (Cout, Cin, 3, 3) -> (ky, kx, Cout, Cin) -> (9, Cout, Cin): per-tap
    # leading index keeps the (Cout, Cin) minor dims clean for the MXU and
    # avoids any lane-misaligned weight slicing in-kernel.
    w1t = jnp.transpose(w1, (2, 3, 0, 1)).reshape(9, C, C).astype(matmul_dtype)
    w2t = jnp.transpose(w2, (2, 3, 0, 1)).reshape(9, C, C).astype(matmul_dtype)

    kernel = functools.partial(residual_block_kernel, width=W,
                               matmul_dtype=matmul_dtype)

    out_flat = pl.pallas_call(
        kernel,
        out_shape=jax.ShapeDtypeStruct((N, C, HW), x.dtype),
        grid_spec=pltpu.PrefetchScalarGridSpec(
            num_scalar_prefetch=0,
            grid=(N,),
            in_specs=[
                pl.BlockSpec((1, C, HW), lambda n: (n, 0, 0)),
                # TODO(synk): pipeline_mode=pl.Buffered(1) on the constant
                # weight blocks would drop one weight copy (helps v7x VMEM).
                pl.BlockSpec((9, C, C), lambda n: (0, 0, 0)),
                pl.BlockSpec((9, C, C), lambda n: (0, 0, 0)),
            ],
            out_specs=pl.BlockSpec((1, C, HW), lambda n: (n, 0, 0)),
        ),
        compiler_params=pltpu.CompilerParams(
            dimension_semantics=("parallel",),
            vmem_limit_bytes=48 * 1024 * 1024),
    )(x_flat, w1t, w2t)

    return out_flat.reshape(N, C, H, W)


def residual_block_ref(x, w1, b1, w2, b2):
    """Pure-JAX reference (same semantics as the PyTorch module, with biases)."""
    eps = 1e-5

    def conv(t, w, b):
        tp = jnp.pad(t, ((0, 0), (0, 0), (1, 1), (1, 1)), mode="reflect")
        y = jax.lax.conv_general_dilated(
            tp, w, window_strides=(1, 1), padding="VALID",
            dimension_numbers=("NCHW", "OIHW", "NCHW"))
        return y + b.reshape(1, -1, 1, 1)

    def inorm(t):
        m = jnp.mean(t, axis=(2, 3), keepdims=True)
        v = jnp.mean((t - m) ** 2, axis=(2, 3), keepdims=True)
        return (t - m) / jnp.sqrt(v + eps)

    y = jnp.maximum(inorm(conv(x, w1, b1)), 0.0)
    y = inorm(conv(y, w2, b2))
    return x + y


if __name__ == "__main__":
    key = jax.random.PRNGKey(0)
    kx, kw1, kb1, kw2, kb2 = jax.random.split(key, 5)

    N, C, H, W = 2, 4, 16, 16
    x = jax.random.normal(kx, (N, C, H, W), dtype=jnp.float32)
    # Deterministic synthetic parameters (Conv2d(C, C, 3) weights + biases).
    w1 = 0.1 * jax.random.normal(kw1, (C, C, 3, 3), dtype=jnp.float32)
    b1 = 0.1 * jax.random.normal(kb1, (C,), dtype=jnp.float32)
    w2 = 0.1 * jax.random.normal(kw2, (C, C, 3, 3), dtype=jnp.float32)
    b2 = 0.1 * jax.random.normal(kb2, (C,), dtype=jnp.float32)

    ref = jax.block_until_ready(residual_block_ref(x, w1, b1, w2, b2))

    # Default f32-MXU path: must match the f32 reference tightly.
    out = jax.block_until_ready(residual_block(x, w1, b1, w2, b2))
    assert out.shape == (N, C, H, W)
    assert jnp.allclose(out, ref, atol=1e-4, rtol=1e-4), float(
        jnp.max(jnp.abs(out - ref)))

    # bf16 MXU-operand path (recommended on v5e/v6e/v7x); looser tolerance.
    out_bf16 = jax.block_until_ready(
        residual_block(x, w1, b1, w2, b2, matmul_dtype=jnp.bfloat16))
    assert float(jnp.max(jnp.abs(out_bf16 - ref))) < 0.2

    print("KERNEL_OK")
</pallas_src>

<mosaic_0001>
module attributes {stable_mosaic.version = 11 : i64} {
  func.func @residual_block_kernel(%arg0: i32, %arg1: memref<1x4x256xf32, #tpu.memory_space<vmem>>, %arg2: memref<9x4x4xf32, #tpu.memory_space<vmem>>, %arg3: memref<9x4x4xf32, #tpu.memory_space<vmem>>, %arg4: memref<1x4x256xf32, #tpu.memory_space<vmem>>) attributes {dimension_semantics = [#tpu.dimension_semantics<parallel>], iteration_bounds = array<i64: 2>, scalar_prefetch = 0 : i64, scratch_operands = 0 : i64, tpu.core_type = #tpu.core_type<tc>, window_params = [{transform_indices = @transform_0, window_bounds = array<i64: 1, 4, 256>}, {pipeline_mode = #tpu.pipeline_mode<synchronous>, transform_indices = @transform_1, window_bounds = array<i64: 9, 4, 4>}, {pipeline_mode = #tpu.pipeline_mode<synchronous>, transform_indices = @transform_2, window_bounds = array<i64: 9, 4, 4>}, {transform_indices = @transform_3, window_bounds = array<i64: 1, 4, 256>}]} {
    %0 = tpu.iota {dimensions = array<i32: 1>} : vector<1x256xi32>
    %c16_i32 = arith.constant 16 : i32
    %c0_i32 = arith.constant 0 : i32
    %1 = arith.cmpi eq, %c16_i32, %c0_i32 : i32
    %c1_i32 = arith.constant 1 : i32
    %2 = arith.select %1, %c1_i32, %c16_i32 : i32
    %3 = vector.broadcast %2 : i32 to vector<1x256xi32>
    %4 = arith.remsi %0, %3 : vector<1x256xi32>
    %c0_i32_0 = arith.constant 0 : i32
    %5 = vector.broadcast %c0_i32_0 : i32 to vector<1x256xi32>
    %6 = arith.cmpi ne, %4, %5 : vector<1x256xi32>
    %c0_i32_1 = arith.constant 0 : i32
    %7 = vector.broadcast %c0_i32_1 : i32 to vector<1x256xi32>
    %8 = arith.cmpi slt, %4, %7 : vector<1x256xi32>
    %c0_i32_2 = arith.constant 0 : i32
    %9 = arith.cmpi slt, %2, %c0_i32_2 : i32
    %10 = vector.broadcast %9 : i1 to vector<1x256xi1>
    %11 = vector.broadcast %10 : vector<1x256xi1> to vector<1x256xi1>
    %12 = arith.xori %8, %11 : vector<1x256xi1>
    %13 = arith.andi %12, %6 : vector<1x256xi1>
    %14 = vector.broadcast %2 : i32 to vector<1x256xi32>
    %15 = arith.addi %4, %14 : vector<1x256xi32>
    %16 = arith.select %13, %15, %4 : vector<1x256xi1>, vector<1x256xi32>
    %c16_i32_3 = arith.constant 16 : i32
    %17 = vector.broadcast %c16_i32_3 : i32 to vector<1x256xi32>
    %18 = arith.cmpi slt, %0, %17 : vector<1x256xi32>
    %c240_i32 = arith.constant 240 : i32
    %19 = vector.broadcast %c240_i32 : i32 to vector<1x256xi32>
    %20 = arith.cmpi sge, %0, %19 : vector<1x256xi32>
    %c0_i32_4 = arith.constant 0 : i32
    %21 = vector.broadcast %c0_i32_4 : i32 to vector<1x256xi32>
    %22 = arith.cmpi eq, %16, %21 : vector<1x256xi32>
    %c15_i32 = arith.constant 15 : i32
    %23 = vector.broadcast %c15_i32 : i32 to vector<1x256xi32>
    %24 = arith.cmpi eq, %16, %23 : vector<1x256xi32>
    %c0 = arith.constant 0 : index
    %c0_5 = arith.constant 0 : index
    %c0_6 = arith.constant 0 : index
    %25 = vector.load %arg1[%c0, %c0_5, %c0_6] : memref<1x4x256xf32, #tpu.memory_space<vmem>>, vector<1x4x256xf32>
    %26 = vector.shape_cast %25 : vector<1x4x256xf32> to vector<4x256xf32>
    %c16_i32_7 = arith.constant 16 : i32
    %27 = tpu.dynamic_rotate %26 by %c16_i32_7 dim 1 : vector<4x256xf32>, i32 -> vector<4x256xf32>
    %c240_i32_8 = arith.constant 240 : i32
    %28 = tpu.dynamic_rotate %26 by %c240_i32_8 dim 1 : vector<4x256xf32>, i32 -> vector<4x256xf32>
    %29 = vector.shape_cast %18 : vector<1x256xi1> to vector<1x256xi1>
    %30 = vector.broadcast %29 : vector<1x256xi1> to vector<4x256xi1>
    %31 = arith.select %30, %28, %27 : vector<4x256xi1>, vector<4x256xf32>
    %32 = vector.shape_cast %20 : vector<1x256xi1> to vector<1x256xi1>
    %33 = vector.broadcast %32 : vector<1x256xi1> to vector<4x256xi1>
    %34 = arith.select %33, %27, %28 : vector<4x256xi1>, vector<4x256xf32>
    %cst = arith.constant 0.000000e+00 : f32
    %35 = vector.broadcast %cst : f32 to vector<4x256xf32>
    %c1_i32_9 = arith.constant 1 : i32
    %36 = tpu.dynamic_rotate %31 by %c1_i32_9 dim 1 : vector<4x256xf32>, i32 -> vector<4x256xf32>
    %c255_i32 = arith.constant 255 : i32
    %37 = tpu.dynamic_rotate %31 by %c255_i32 dim 1 : vector<4x256xf32>, i32 -> vector<4x256xf32>
    %38 = vector.shape_cast %22 : vector<1x256xi1> to vector<1x256xi1>
    %39 = vector.broadcast %38 : vector<1x256xi1> to vector<4x256xi1>
    %40 = arith.select %39, %37, %36 : vector<4x256xi1>, vector<4x256xf32>
    %41 = vector.shape_cast %24 : vector<1x256xi1> to vector<1x256xi1>
    %42 = vector.broadcast %41 : vector<1x256xi1> to vector<4x256xi1>
    %43 = arith.select %42, %36, %37 : vector<4x256xi1>, vector<4x256xf32>
    %c0_10 = arith.constant 0 : index
    %c0_11 = arith.constant 0 : index
    %c0_12 = arith.constant 0 : index
    %44 = vector.load %arg2[%c0_10, %c0_11, %c0_12] : memref<9x4x4xf32, #tpu.memory_space<vmem>>, vector<1x4x4xf32>
    %45 = vector.shape_cast %44 : vector<1x4x4xf32> to vector<4x4xf32>
    %cst_13 = arith.constant dense<0.000000e+00> : vector<4x256xf32>
    %46 = tpu.matmul %45, %40, %cst_13 {dimension_numbers = #tpu.dot_dimension_numbers<[1], [0], [0], [1], [0, 0, 1, 1], [], []>} : vector<4x4xf32>, vector<4x256xf32>, vector<4x256xf32> -> vector<4x256xf32>
    %47 = arith.addf %35, %46 : vector<4x256xf32>
    %c1 = arith.constant 1 : index
    %c0_14 = arith.constant 0 : index
    %c0_15 = arith.constant 0 : index
    %48 = vector.load %arg2[%c1, %c0_14, %c0_15] : memref<9x4x4xf32, #tpu.memory_space<vmem>>, vector<1x4x4xf32>
    %49 = vector.shape_cast %48 : vector<1x4x4xf32> to vector<4x4xf32>
    %cst_16 = arith.constant dense<0.000000e+00> : vector<4x256xf32>
    %50 = tpu.matmul %49, %31, %cst_16 {dimension_numbers = #tpu.dot_dimension_numbers<[1], [0], [0], [1], [0, 0, 1, 1], [], []>} : vector<4x4xf32>, vector<4x256xf32>, vector<4x256xf32> -> vector<4x256xf32>
    %51 = arith.addf %47, %50 : vector<4x256xf32>
    %c2 = arith.constant 2 : index
    %c0_17 = arith.constant 0 : index
    %c0_18 = arith.constant 0 : index
    %52 = vector.load %arg2[%c2, %c0_17, %c0_18] : memref<9x4x4xf32, #tpu.memory_space<vmem>>, vector<1x4x4xf32>
    %53 = vector.shape_cast %52 : vector<1x4x4xf32> to vector<4x4xf32>
    %cst_19 = arith.constant dense<0.000000e+00> : vector<4x256xf32>
    %54 = tpu.matmul %53, %43, %cst_19 {dimension_numbers = #tpu.dot_dimension_numbers<[1], [0], [0], [1], [0, 0, 1, 1], [], []>} : vector<4x4xf32>, vector<4x256xf32>, vector<4x256xf32> -> vector<4x256xf32>
    %55 = arith.addf %51, %54 : vector<4x256xf32>
    %c1_i32_20 = arith.constant 1 : i32
    %56 = tpu.dynamic_rotate %26 by %c1_i32_20 dim 1 : vector<4x256xf32>, i32 -> vector<4x256xf32>
    %c255_i32_21 = arith.constant 255 : i32
    %57 = tpu.dynamic_rotate %26 by %c255_i32_21 dim 1 : vector<4x256xf32>, i32 -> vector<4x256xf32>
    %58 = vector.shape_cast %22 : vector<1x256xi1> to vector<1x256xi1>
    %59 = vector.broadcast %58 : vector<1x256xi1> to vector<4x256xi1>
    %60 = arith.select %59, %57, %56 : vector<4x256xi1>, vector<4x256xf32>
    %61 = vector.shape_cast %24 : vector<1x256xi1> to vector<1x256xi1>
    %62 = vector.broadcast %61 : vector<1x256xi1> to vector<4x256xi1>
    %63 = arith.select %62, %56, %57 : vector<4x256xi1>, vector<4x256xf32>
    %c3 = arith.constant 3 : index
    %c0_22 = arith.constant 0 : index
    %c0_23 = arith.constant 0 : index
    %64 = vector.load %arg2[%c3, %c0_22, %c0_23] : memref<9x4x4xf32, #tpu.memory_space<vmem>>, vector<1x4x4xf32>
    %65 = vector.shape_cast %64 : vector<1x4x4xf32> to vector<4x4xf32>
    %cst_24 = arith.constant dense<0.000000e+00> : vector<4x256xf32>
    %66 = tpu.matmul %65, %60, %cst_24 {dimension_numbers = #tpu.dot_dimension_numbers<[1], [0], [0], [1], [0, 0, 1, 1], [], []>} : vector<4x4xf32>, vector<4x256xf32>, vector<4x256xf32> -> vector<4x256xf32>
    %67 = arith.addf %55, %66 : vector<4x256xf32>
    %c4 = arith.constant 4 : index
    %c0_25 = arith.constant 0 : index
    %c0_26 = arith.constant 0 : index
    %68 = vector.load %arg2[%c4, %c0_25, %c0_26] : memref<9x4x4xf32, #tpu.memory_space<vmem>>, vector<1x4x4xf32>
    %69 = vector.shape_cast %68 : vector<1x4x4xf32> to vector<4x4xf32>
    %cst_27 = arith.constant dense<0.000000e+00> : vector<4x256xf32>
    %70 = tpu.matmul %69, %26, %cst_27 {dimension_numbers = #tpu.dot_dimension_numbers<[1], [0], [0], [1], [0, 0, 1, 1], [], []>} : vector<4x4xf32>, vector<4x256xf32>, vector<4x256xf32> -> vector<4x256xf32>
    %71 = arith.addf %67, %70 : vector<4x256xf32>
    %c5 = arith.constant 5 : index
    %c0_28 = arith.constant 0 : index
    %c0_29 = arith.constant 0 : index
    %72 = vector.load %arg2[%c5, %c0_28, %c0_29] : memref<9x4x4xf32, #tpu.memory_space<vmem>>, vector<1x4x4xf32>
    %73 = vector.shape_cast %72 : vector<1x4x4xf32> to vector<4x4xf32>
    %cst_30 = arith.constant dense<0.000000e+00> : vector<4x256xf32>
    %74 = tpu.matmul %73, %63, %cst_30 {dimension_numbers = #tpu.dot_dimension_numbers<[1], [0], [0], [1], [0, 0, 1, 1], [], []>} : vector<4x4xf32>, vector<4x256xf32>, vector<4x256xf32> -> vector<4x256xf32>
    %75 = arith.addf %71, %74 : vector<4x256xf32>
    %c1_i32_31 = arith.constant 1 : i32
    %76 = tpu.dynamic_rotate %34 by %c1_i32_31 dim 1 : vector<4x256xf32>, i32 -> vector<4x256xf32>
    %c255_i32_32 = arith.constant 255 : i32
    %77 = tpu.dynamic_rotate %34 by %c255_i32_32 dim 1 : vector<4x256xf32>, i32 -> vector<4x256xf32>
    %78 = vector.shape_cast %22 : vector<1x256xi1> to vector<1x256xi1>
    %79 = vector.broadcast %78 : vector<1x256xi1> to vector<4x256xi1>
    %80 = arith.select %79, %77, %76 : vector<4x256xi1>, vector<4x256xf32>
    %81 = vector.shape_cast %24 : vector<1x256xi1> to vector<1x256xi1>
    %82 = vector.broadcast %81 : vector<1x256xi1> to vector<4x256xi1>
    %83 = arith.select %82, %76, %77 : vector<4x256xi1>, vector<4x256xf32>
    %c6 = arith.constant 6 : index
    %c0_33 = arith.constant 0 : index
    %c0_34 = arith.constant 0 : index
    %84 = vector.load %arg2[%c6, %c0_33, %c0_34] : memref<9x4x4xf32, #tpu.memory_space<vmem>>, vector<1x4x4xf32>
    %85 = vector.shape_cast %84 : vector<1x4x4xf32> to vector<4x4xf32>
    %cst_35 = arith.constant dense<0.000000e+00> : vector<4x256xf32>
    %86 = tpu.matmul %85, %80, %cst_35 {dimension_numbers = #tpu.dot_dimension_numbers<[1], [0], [0], [1], [0, 0, 1, 1], [], []>} : vector<4x4xf32>, vector<4x256xf32>, vector<4x256xf32> -> vector<4x256xf32>
    %87 = arith.addf %75, %86 : vector<4x256xf32>
    %c7 = arith.constant 7 : index
    %c0_36 = arith.constant 0 : index
    %c0_37 = arith.constant 0 : index
    %88 = vector.load %arg2[%c7, %c0_36, %c0_37] : memref<9x4x4xf32, #tpu.memory_space<vmem>>, vector<1x4x4xf32>
    %89 = vector.shape_cast %88 : vector<1x4x4xf32> to vector<4x4xf32>
    %cst_38 = arith.constant dense<0.000000e+00> : vector<4x256xf32>
    %90 = tpu.matmul %89, %34, %cst_38 {dimension_numbers = #tpu.dot_dimension_numbers<[1], [0], [0], [1], [0, 0, 1, 1], [], []>} : vector<4x4xf32>, vector<4x256xf32>, vector<4x256xf32> -> vector<4x256xf32>
    %91 = arith.addf %87, %90 : vector<4x256xf32>
    %c8 = arith.constant 8 : index
    %c0_39 = arith.constant 0 : index
    %c0_40 = arith.constant 0 : index
    %92 = vector.load %arg2[%c8, %c0_39, %c0_40] : memref<9x4x4xf32, #tpu.memory_space<vmem>>, vector<1x4x4xf32>
    %93 = vector.shape_cast %92 : vector<1x4x4xf32> to vector<4x4xf32>
    %cst_41 = arith.constant dense<0.000000e+00> : vector<4x256xf32>
    %94 = tpu.matmul %93, %83, %cst_41 {dimension_numbers = #tpu.dot_dimension_numbers<[1], [0], [0], [1], [0, 0, 1, 1], [], []>} : vector<4x4xf32>, vector<4x256xf32>, vector<4x256xf32> -> vector<4x256xf32>
    %95 = arith.addf %91, %94 : vector<4x256xf32>
    %cst_42 = arith.constant dense<0.000000e+00> : vector<4xf32>
    %96 = vector.multi_reduction <add>, %95, %cst_42 [1] : vector<4x256xf32> to vector<4xf32>
    %97 = vector.shape_cast %96 : vector<4xf32> to vector<4x1xf32>
    %cst_43 = arith.constant 2.560000e+02 : f32
    %98 = vector.broadcast %cst_43 : f32 to vector<4x1xf32>
    %99 = arith.divf %97, %98 : vector<4x1xf32>
    %100 = vector.broadcast %99 : vector<4x1xf32> to vector<4x256xf32>
    %101 = arith.subf %95, %100 : vector<4x256xf32>
    %102 = arith.mulf %101, %101 : vector<4x256xf32>
    %cst_44 = arith.constant dense<0.000000e+00> : vector<4xf32>
    %103 = vector.multi_reduction <add>, %102, %cst_44 [1] : vector<4x256xf32> to vector<4xf32>
    %104 = vector.shape_cast %103 : vector<4xf32> to vector<4x1xf32>
    %cst_45 = arith.constant 2.560000e+02 : f32
    %105 = vector.broadcast %cst_45 : f32 to vector<4x1xf32>
    %106 = arith.divf %104, %105 : vector<4x1xf32>
    %cst_46 = arith.constant 9.99999974E-6 : f32
    %107 = vector.broadcast %cst_46 : f32 to vector<4x1xf32>
    %108 = arith.addf %106, %107 : vector<4x1xf32>
    %109 = math.rsqrt %108 : vector<4x1xf32>
    %110 = vector.broadcast %109 : vector<4x1xf32> to vector<4x256xf32>
    %111 = arith.mulf %101, %110 : vector<4x256xf32>
    %cst_47 = arith.constant 0.000000e+00 : f32
    %112 = vector.broadcast %cst_47 : f32 to vector<4x256xf32>
    %113 = arith.maximumf %111, %112 : vector<4x256xf32>
    %c16_i32_48 = arith.constant 16 : i32
    %114 = tpu.dynamic_rotate %113 by %c16_i32_48 dim 1 : vector<4x256xf32>, i32 -> vector<4x256xf32>
    %c240_i32_49 = arith.constant 240 : i32
    %115 = tpu.dynamic_rotate %113 by %c240_i32_49 dim 1 : vector<4x256xf32>, i32 -> vector<4x256xf32>
    %116 = vector.shape_cast %18 : vector<1x256xi1> to vector<1x256xi1>
    %117 = vector.broadcast %116 : vector<1x256xi1> to vector<4x256xi1>
    %118 = arith.select %117, %115, %114 : vector<4x256xi1>, vector<4x256xf32>
    %119 = vector.shape_cast %20 : vector<1x256xi1> to vector<1x256xi1>
    %120 = vector.broadcast %119 : vector<1x256xi1> to vector<4x256xi1>
    %121 = arith.select %120, %114, %115 : vector<4x256xi1>, vector<4x256xf32>
    %cst_50 = arith.constant 0.000000e+00 : f32
    %122 = vector.broadcast %cst_50 : f32 to vector<4x256xf32>
    %c1_i32_51 = arith.constant 1 : i32
    %123 = tpu.dynamic_rotate %118 by %c1_i32_51 dim 1 : vector<4x256xf32>, i32 -> vector<4x256xf32>
    %c255_i32_52 = arith.constant 255 : i32
    %124 = tpu.dynamic_rotate %118 by %c255_i32_52 dim 1 : vector<4x256xf32>, i32 -> vector<4x256xf32>
    %125 = vector.shape_cast %22 : vector<1x256xi1> to vector<1x256xi1>
    %126 = vector.broadcast %125 : vector<1x256xi1> to vector<4x256xi1>
    %127 = arith.select %126, %124, %123 : vector<4x256xi1>, vector<4x256xf32>
    %128 = vector.shape_cast %24 : vector<1x256xi1> to vector<1x256xi1>
    %129 = vector.broadcast %128 : vector<1x256xi1> to vector<4x256xi1>
    %130 = arith.select %129, %123, %124 : vector<4x256xi1>, vector<4x256xf32>
    %c0_53 = arith.constant 0 : index
    %c0_54 = arith.constant 0 : index
    %c0_55 = arith.constant 0 : index
    %131 = vector.load %arg3[%c0_53, %c0_54, %c0_55] : memref<9x4x4xf32, #tpu.memory_space<vmem>>, vector<1x4x4xf32>
    %132 = vector.shape_cast %131 : vector<1x4x4xf32> to vector<4x4xf32>
    %cst_56 = arith.constant dense<0.000000e+00> : vector<4x256xf32>
    %133 = tpu.matmul %132, %127, %cst_56 {dimension_numbers = #tpu.dot_dimension_numbers<[1], [0], [0], [1], [0, 0, 1, 1], [], []>} : vector<4x4xf32>, vector<4x256xf32>, vector<4x256xf32> -> vector<4x256xf32>
    %134 = arith.addf %122, %133 : vector<4x256xf32>
    %c1_57 = arith.constant 1 : index
    %c0_58 = arith.constant 0 : index
    %c0_59 = arith.constant 0 : index
    %135 = vector.load %arg3[%c1_57, %c0_58, %c0_59] : memref<9x4x4xf32, #tpu.memory_space<vmem>>, vector<1x4x4xf32>
    %136 = vector.shape_cast %135 : vector<1x4x4xf32> to vector<4x4xf32>
    %cst_60 = arith.constant dense<0.000000e+00> : vector<4x256xf32>
    %137 = tpu.matmul %136, %118, %cst_60 {dimension_numbers = #tpu.dot_dimension_numbers<[1], [0], [0], [1], [0, 0, 1, 1], [], []>} : vector<4x4xf32>, vector<4x256xf32>, vector<4x256xf32> -> vector<4x256xf32>
    %138 = arith.addf %134, %137 : vector<4x256xf32>
    %c2_61 = arith.constant 2 : index
    %c0_62 = arith.constant 0 : index
    %c0_63 = arith.constant 0 : index
    %139 = vector.load %arg3[%c2_61, %c0_62, %c0_63] : memref<9x4x4xf32, #tpu.memory_space<vmem>>, vector<1x4x4xf32>
    %140 = vector.shape_cast %139 : vector<1x4x4xf32> to vector<4x4xf32>
    %cst_64 = arith.constant dense<0.000000e+00> : vector<4x256xf32>
    %141 = tpu.matmul %140, %130, %cst_64 {dimension_numbers = #tpu.dot_dimension_numbers<[1], [0], [0], [1], [0, 0, 1, 1], [], []>} : vector<4x4xf32>, vector<4x256xf32>, vector<4x256xf32> -> vector<4x256xf32>
    %142 = arith.addf %138, %141 : vector<4x256xf32>
    %c1_i32_65 = arith.constant 1 : i32
    %143 = tpu.dynamic_rotate %113 by %c1_i32_65 dim 1 : vector<4x256xf32>, i32 -> vector<4x256xf32>
    %c255_i32_66 = arith.constant 255 : i32
    %144 = tpu.dynamic_rotate %113 by %c255_i32_66 dim 1 : vector<4x256xf32>, i32 -> vector<4x256xf32>
    %145 = vector.shape_cast %22 : vector<1x256xi1> to vector<1x256xi1>
    %146 = vector.broadcast %145 : vector<1x256xi1> to vector<4x256xi1>
    %147 = arith.select %146, %144, %143 : vector<4x256xi1>, vector<4x256xf32>
    %148 = vector.shape_cast %24 : vector<1x256xi1> to vector<1x256xi1>
    %149 = vector.broadcast %148 : vector<1x256xi1> to vector<4x256xi1>
    %150 = arith.select %149, %143, %144 : vector<4x256xi1>, vector<4x256xf32>
    %c3_67 = arith.constant 3 : index
    %c0_68 = arith.constant 0 : index
    %c0_69 = arith.constant 0 : index
    %151 = vector.load %arg3[%c3_67, %c0_68, %c0_69] : memref<9x4x4xf32, #tpu.memory_space<vmem>>, vector<1x4x4xf32>
    %152 = vector.shape_cast %151 : vector<1x4x4xf32> to vector<4x4xf32>
    %cst_70 = arith.constant dense<0.000000e+00> : vector<4x256xf32>
    %153 = tpu.matmul %152, %147, %cst_70 {dimension_numbers = #tpu.dot_dimension_numbers<[1], [0], [0], [1], [0, 0, 1, 1], [], []>} : vector<4x4xf32>, vector<4x256xf32>, vector<4x256xf32> -> vector<4x256xf32>
    %154 = arith.addf %142, %153 : vector<4x256xf32>
    %c4_71 = arith.constant 4 : index
    %c0_72 = arith.constant 0 : index
    %c0_73 = arith.constant 0 : index
    %155 = vector.load %arg3[%c4_71, %c0_72, %c0_73] : memref<9x4x4xf32, #tpu.memory_space<vmem>>, vector<1x4x4xf32>
    %156 = vector.shape_cast %155 : vector<1x4x4xf32> to vector<4x4xf32>
    %cst_74 = arith.constant dense<0.000000e+00> : vector<4x256xf32>
    %157 = tpu.matmul %156, %113, %cst_74 {dimension_numbers = #tpu.dot_dimension_numbers<[1], [0], [0], [1], [0, 0, 1, 1], [], []>} : vector<4x4xf32>, vector<4x256xf32>, vector<4x256xf32> -> vector<4x256xf32>
    %158 = arith.addf %154, %157 : vector<4x256xf32>
    %c5_75 = arith.constant 5 : index
    %c0_76 = arith.constant 0 : index
    %c0_77 = arith.constant 0 : index
    %159 = vector.load %arg3[%c5_75, %c0_76, %c0_77] : memref<9x4x4xf32, #tpu.memory_space<vmem>>, vector<1x4x4xf32>
    %160 = vector.shape_cast %159 : vector<1x4x4xf32> to vector<4x4xf32>
    %cst_78 = arith.constant dense<0.000000e+00> : vector<4x256xf32>
    %161 = tpu.matmul %160, %150, %cst_78 {dimension_numbers = #tpu.dot_dimension_numbers<[1], [0], [0], [1], [0, 0, 1, 1], [], []>} : vector<4x4xf32>, vector<4x256xf32>, vector<4x256xf32> -> vector<4x256xf32>
    %162 = arith.addf %158, %161 : vector<4x256xf32>
    %c1_i32_79 = arith.constant 1 : i32
    %163 = tpu.dynamic_rotate %121 by %c1_i32_79 dim 1 : vector<4x256xf32>, i32 -> vector<4x256xf32>
    %c255_i32_80 = arith.constant 255 : i32
    %164 = tpu.dynamic_rotate %121 by %c255_i32_80 dim 1 : vector<4x256xf32>, i32 -> vector<4x256xf32>
    %165 = vector.shape_cast %22 : vector<1x256xi1> to vector<1x256xi1>
    %166 = vector.broadcast %165 : vector<1x256xi1> to vector<4x256xi1>
    %167 = arith.select %166, %164, %163 : vector<4x256xi1>, vector<4x256xf32>
    %168 = vector.shape_cast %24 : vector<1x256xi1> to vector<1x256xi1>
    %169 = vector.broadcast %168 : vector<1x256xi1> to vector<4x256xi1>
    %170 = arith.select %169, %163, %164 : vector<4x256xi1>, vector<4x256xf32>
    %c6_81 = arith.constant 6 : index
    %c0_82 = arith.constant 0 : index
    %c0_83 = arith.constant 0 : index
    %171 = vector.load %arg3[%c6_81, %c0_82, %c0_83] : memref<9x4x4xf32, #tpu.memory_space<vmem>>, vector<1x4x4xf32>
    %172 = vector.shape_cast %171 : vector<1x4x4xf32> to vector<4x4xf32>
    %cst_84 = arith.constant dense<0.000000e+00> : vector<4x256xf32>
    %173 = tpu.matmul %172, %167, %cst_84 {dimension_numbers = #tpu.dot_dimension_numbers<[1], [0], [0], [1], [0, 0, 1, 1], [], []>} : vector<4x4xf32>, vector<4x256xf32>, vector<4x256xf32> -> vector<4x256xf32>
    %174 = arith.addf %162, %173 : vector<4x256xf32>
    %c7_85 = arith.constant 7 : index
    %c0_86 = arith.constant 0 : index
    %c0_87 = arith.constant 0 : index
    %175 = vector.load %arg3[%c7_85, %c0_86, %c0_87] : memref<9x4x4xf32, #tpu.memory_space<vmem>>, vector<1x4x4xf32>
    %176 = vector.shape_cast %175 : vector<1x4x4xf32> to vector<4x4xf32>
    %cst_88 = arith.constant dense<0.000000e+00> : vector<4x256xf32>
    %177 = tpu.matmul %176, %121, %cst_88 {dimension_numbers = #tpu.dot_dimension_numbers<[1], [0], [0], [1], [0, 0, 1, 1], [], []>} : vector<4x4xf32>, vector<4x256xf32>, vector<4x256xf32> -> vector<4x256xf32>
    %178 = arith.addf %174, %177 : vector<4x256xf32>
    %c8_89 = arith.constant 8 : index
    %c0_90 = arith.constant 0 : index
    %c0_91 = arith.constant 0 : index
    %179 = vector.load %arg3[%c8_89, %c0_90, %c0_91] : memref<9x4x4xf32, #tpu.memory_space<vmem>>, vector<1x4x4xf32>
    %180 = vector.shape_cast %179 : vector<1x4x4xf32> to vector<4x4xf32>
    %cst_92 = arith.constant dense<0.000000e+00> : vector<4x256xf32>
    %181 = tpu.matmul %180, %170, %cst_92 {dimension_numbers = #tpu.dot_dimension_numbers<[1], [0], [0], [1], [0, 0, 1, 1], [], []>} : vector<4x4xf32>, vector<4x256xf32>, vector<4x256xf32> -> vector<4x256xf32>
    %182 = arith.addf %178, %181 : vector<4x256xf32>
    %cst_93 = arith.constant dense<0.000000e+00> : vector<4xf32>
    %183 = vector.multi_reduction <add>, %182, %cst_93 [1] : vector<4x256xf32> to vector<4xf32>
    %184 = vector.shape_cast %183 : vector<4xf32> to vector<4x1xf32>
    %cst_94 = arith.constant 2.560000e+02 : f32
    %185 = vector.broadcast %cst_94 : f32 to vector<4x1xf32>
    %186 = arith.divf %184, %185 : vector<4x1xf32>
    %187 = vector.broadcast %186 : vector<4x1xf32> to vector<4x256xf32>
    %188 = arith.subf %182, %187 : vector<4x256xf32>
    %189 = arith.mulf %188, %188 : vector<4x256xf32>
    %cst_95 = arith.constant dense<0.000000e+00> : vector<4xf32>
    %190 = vector.multi_reduction <add>, %189, %cst_95 [1] : vector<4x256xf32> to vector<4xf32>
    %191 = vector.shape_cast %190 : vector<4xf32> to vector<4x1xf32>
    %cst_96 = arith.constant 2.560000e+02 : f32
    %192 = vector.broadcast %cst_96 : f32 to vector<4x1xf32>
    %193 = arith.divf %191, %192 : vector<4x1xf32>
    %cst_97 = arith.constant 9.99999974E-6 : f32
    %194 = vector.broadcast %cst_97 : f32 to vector<4x1xf32>
    %195 = arith.addf %193, %194 : vector<4x1xf32>
    %196 = math.rsqrt %195 : vector<4x1xf32>
    %197 = vector.broadcast %196 : vector<4x1xf32> to vector<4x256xf32>
    %198 = arith.mulf %188, %197 : vector<4x256xf32>
    %199 = arith.addf %26, %198 : vector<4x256xf32>
    %c0_98 = arith.constant 0 : index
    %c0_99 = arith.constant 0 : index
    %c0_100 = arith.constant 0 : index
    %200 = vector.load %arg4[%c0_98, %c0_99, %c0_100] : memref<1x4x256xf32, #tpu.memory_space<vmem>>, vector<1x4x256xf32>
    %201 = vector.shape_cast %200 : vector<1x4x256xf32> to vector<4x256xf32>
    %202 = vector.shape_cast %199 : vector<4x256xf32> to vector<1x4x256xf32>
    tpu.vector_store %arg4[%c0_98, %c0_99, %c0_100], %202 {strides = array<i32>} : memref<1x4x256xf32, #tpu.memory_space<vmem>>, vector<1x4x256xf32>,
    return
  }
  func.func @transform_0(%arg0: i32) -> (i32, i32, i32) {
    %c0_i32 = arith.constant 0 : i32
    %c0_i32_0 = arith.constant 0 : i32
    %c0_i32_1 = arith.constant 0 : i32
    return %arg0, %c0_i32, %c0_i32_0 : i32, i32, i32
  }
  func.func @transform_1(%arg0: i32) -> (i32, i32, i32) {
    %c0_i32 = arith.constant 0 : i32
    %c0_i32_0 = arith.constant 0 : i32
    %c0_i32_1 = arith.constant 0 : i32
    %c0_i32_2 = arith.constant 0 : i32
    return %c0_i32, %c0_i32_0, %c0_i32_1 : i32, i32, i32
  }
  func.func @transform_2(%arg0: i32) -> (i32, i32, i32) {
    %c0_i32 = arith.constant 0 : i32
    %c0_i32_0 = arith.constant 0 : i32
    %c0_i32_1 = arith.constant 0 : i32
    %c0_i32_2 = arith.constant 0 : i32
    return %c0_i32, %c0_i32_0, %c0_i32_1 : i32, i32, i32
  }
  func.func @transform_3(%arg0: i32) -> (i32, i32, i32) {
    %c0_i32 = arith.constant 0 : i32
    %c0_i32_0 = arith.constant 0 : i32
    %c0_i32_1 = arith.constant 0 : i32
    return %arg0, %c0_i32, %c0_i32_0 : i32, i32, i32
  }
}

</mosaic_0001>

<llo_original>
// kernel: tpu_custom_call.1
$region0: #{tpu_custom_call.1}
  #allocation0 [shape = 'u32[]', space=smem, size = 0x4, offset = 0x4, fixed_abs, tag = 'smem constant byte address 0x4 - core index']
  #allocation1 [shape = 'u32[72,128]{1,0:T(1,128)}', space=vmem, size = 0x9000, scoped, tag = 'internal scratch']
  %s0 = inlined_call_operand.vmem [shape: f32[2,4,256], index: 0, kind: input, shape index: {}]
  %s1 = inlined_call_operand.vmem [shape: f32[9,4,4], index: 1, kind: input, shape index: {}]
  %s2 = inlined_call_operand.vmem [shape: f32[9,4,4], index: 2, kind: input, shape index: {}]
  %s3 = inlined_call_operand.hbm [shape: f32[2,4,256], index: 3, kind: output, shape index: {}]
  %s4 = sld [smem:[#allocation0]]
  $region45: #{tpu_custom_call.1} parent=0
    _
  %s6 = ssub.s32 1, %s4
  %s7 = scalar_select 0, %s6, %s4
  $region1: #{tpu_custom_call.1} parent=0
    #allocation2 [shape = 'u8[8192]{0}', space=vmem, size = 0x2000, scoped, tag = 'output window, operand 0']
    #allocation3 [shape = 's32[2]{0}', space=sflag, size = 0x8, scoped, tag = 'scoped memory for tpu_custom_call.1']
    %8 = vsyncpa [#allocation3], 0
    %s9 = scalar_lea.sflag [#allocation3], 1
    %10 = vsyncpa %s9, 0
    loop: start=0, step=1, limit=4
    $region2: #{tpu_custom_call.1} parent=1 // loop_pre_header
      _
    $region3: #{tpu_custom_call.1} parent=1 // loop_header
      %s12 = sphi 0, %s16
      %p13 = scmp.ge.s32.totalorder %s12, 4
      %s22 = sphi 0, %s24
      %s25 = sphi 0, %s22
      %s26 = sphi 0, %s25
      %s42 = sphi 0, %s26
      %s46 = sphi 0, %s46
      %s48 = sphi 0, %s46
      %s49 = sphi 0, %s48
      %s63 = sphi 0, %s49
      %s67 = sphi 0, %s67
      %s69 = sphi 0, %s67
      %s70 = sphi 0, %s69
      %s84 = sphi 0, %s70
      %s90 = sphi 0, %s92
      %s93 = sphi 0, %s90
      %s94 = sphi 0, %s93
      %s110 = sphi 0, %s94
    $region4: #{tpu_custom_call.1} parent=1 // loop_header_branch
      %15 = sbr.rel (%p13) target = $region8
    $region5: #{tpu_custom_call.1} parent=1 // loop_body
      %s17 = ssub.s32 %s12, 1
      %s18 = ssub.s32 %s12, 2
      %s19 = sadd.s32 %s12, 1
      %s20 = ssub.s32 %s12, %s19
      %p21 = scmp.eq.s32.totalorder %s20, 0
      %s23 = sadd.s32 %s22, 1
      %s24 = scalar_select %p21, %s22, %s23
      %p27 = pneg %p21
      %p28 = scmp.eq.s32.totalorder %s12, 1
      %p29 = por %p27, %p28
      %p30 = scmp.ne.s32.totalorder %s22, %s25
      %p31 = scmp.eq.s32.totalorder %s12, 0
      %p32 = por %p30, %p31
      %p33 = scmp.ne.s32.totalorder %s22, %s25
      %p34 = scmp.eq.s32.totalorder %s17, 1
      %p35 = por %p33, %p34
      %p36 = scmp.ne.s32.totalorder %s25, %s26
      %p37 = scmp.eq.s32.totalorder %s17, 0
      %p38 = por %p36, %p37
      %p39 = scmp.ne.s32.totalorder %s25, %s26
      %p40 = scmp.eq.s32.totalorder %s18, 1
      %p41 = por %p39, %p40
      %p43 = scmp.ne.s32.totalorder %s26, %s42
      %p44 = scmp.eq.s32.totalorder %s18, 0
      %p45 = por %p43, %p44
      %s47 = sadd.s32 %s46, 1
      %p50 = scmp.eq.s32.totalorder %s12, 1
      %p51 = scmp.ne.s32.totalorder %s46, %s48
      %p52 = scmp.eq.s32.totalorder %s12, 0
      %p53 = por %p51, %p52
      %p54 = scmp.ne.s32.totalorder %s46, %s48
      %p55 = scmp.eq.s32.totalorder %s17, 1
      %p56 = por %p54, %p55
      %p57 = scmp.ne.s32.totalorder %s48, %s49
      %p58 = scmp.eq.s32.totalorder %s17, 0
      %p59 = por %p57, %p58
      %p60 = scmp.ne.s32.totalorder %s48, %s49
      %p61 = scmp.eq.s32.totalorder %s18, 1
      %p62 = por %p60, %p61
      %p64 = scmp.ne.s32.totalorder %s49, %s63
      %p65 = scmp.eq.s32.totalorder %s18, 0
      %p66 = por %p64, %p65
      %s68 = sadd.s32 %s67, 1
      %p71 = scmp.eq.s32.totalorder %s12, 1
      %p72 = scmp.ne.s32.totalorder %s67, %s69
      %p73 = scmp.eq.s32.totalorder %s12, 0
      %p74 = por %p72, %p73
      %p75 = scmp.ne.s32.totalorder %s67, %s69
      %p76 = scmp.eq.s32.totalorder %s17, 1
      %p77 = por %p75, %p76
      %p78 = scmp.ne.s32.totalorder %s69, %s70
      %p79 = scmp.eq.s32.totalorder %s17, 0
      %p80 = por %p78, %p79
      %p81 = scmp.ne.s32.totalorder %s69, %s70
      %p82 = scmp.eq.s32.totalorder %s18, 1
      %p83 = por %p81, %p82
      %p85 = scmp.ne.s32.totalorder %s70, %s84
      %p86 = scmp.eq.s32.totalorder %s18, 0
      %p87 = por %p85, %p86
      %s88 = ssub.s32 %s12, %s19
      %p89 = scmp.eq.s32.totalorder %s88, 0
      %s91 = sadd.s32 %s90, 1
      %s92 = scalar_select %p89, %s90, %s91
      %p95 = pneg %p89
      %p96 = scmp.eq.s32.totalorder %s12, 1
      %p97 = por %p95, %p96
      %p98 = scmp.ne.s32.totalorder %s90, %s93
      %p99 = scmp.eq.s32.totalorder %s12, 0
      %p100 = por %p98, %p99
      %p101 = scmp.ne.s32.totalorder %s90, %s93
      %p102 = scmp.eq.s32.totalorder %s17, 1
      %p103 = por %p101, %p102
      %p104 = scmp.ne.s32.totalorder %s93, %s94
      %p105 = scmp.eq.s32.totalorder %s17, 0
      %p106 = por %p104, %p105
      %p107 = scmp.ne.s32.totalorder %s93, %s94
      %p108 = scmp.eq.s32.totalorder %s18, 1
      %p109 = por %p107, %p108
      %p111 = scmp.ne.s32.totalorder %s94, %s110
      %p112 = scmp.eq.s32.totalorder %s18, 0
      %p113 = por %p111, %p112
      %p114 = scmp.le.s32.totalorder 1, %s12
      %p115 = scmp.lt.s32.totalorder %s12, 3
      %p116 = pnand %p114, %p115
      %p117 = pneg %p116
      // Predicated region
      $region9: #{tpu_custom_call.1} parent=5 // pred_check
        _
      $region10: #{tpu_custom_call.1} parent=5 // pred_check_branch
        %119 = sbr.rel (%p116) target = $region12
      $region11: #{tpu_custom_call.1} parent=5 // pred_region
        %s120 = ssub.s32 %s12, 1
        // Predicated region
        $region13: #{tpu_custom_call.1} parent=11 // pred_check
          %p121 = pneg %p59
        $region14: #{tpu_custom_call.1} parent=11 // pred_check_branch
          %123 = sbr.rel (%p121) target = $region16
        $region15: #{tpu_custom_call.1} parent=11 // pred_region
          _
        $region16: #{tpu_custom_call.1} parent=11 // pred_fallthru
          _
        // Predicated region
        $region17: #{tpu_custom_call.1} parent=11 // pred_check
          %p124 = pneg %p80
        $region18: #{tpu_custom_call.1} parent=11 // pred_check_branch
          %126 = sbr.rel (%p124) target = $region20
        $region19: #{tpu_custom_call.1} parent=11 // pred_region
          _
        $region20: #{tpu_custom_call.1} parent=11 // pred_fallthru
          _
      $region12: #{tpu_custom_call.1} parent=5 // pred_fallthru
        _
      %p127 = scmp.lt.s32.totalorder %s12, 2
      // Predicated region
      $region21: #{tpu_custom_call.1} parent=5 // pred_check
        %p128 = pneg %p127
      $region22: #{tpu_custom_call.1} parent=5 // pred_check_branch
        %130 = sbr.rel (%p128) target = $region24
      $region23: #{tpu_custom_call.1} parent=5 // pred_region
        // Predicated region
        $region25: #{tpu_custom_call.1} parent=23 // pred_check
          %p131 = pneg %p32
        $region26: #{tpu_custom_call.1} parent=23 // pred_check_branch
          %133 = sbr.rel (%p131) target = $region28
        $region27: #{tpu_custom_call.1} parent=23 // pred_region
          %p134 = scmp.lt.s32.totalorder %s12, 1
          %s135 = scalar_select %p134, %s12, 1
          %s136 = smul.addr %s135, 2
          %s137 = smul.addr %s136, 4
          %s138 = scalar_lea.vmem %s0, %s137
        $region28: #{tpu_custom_call.1} parent=23 // pred_fallthru
          _
      $region24: #{tpu_custom_call.1} parent=5 // pred_fallthru
        _
      %p139 = scmp.le.s32.totalorder 1, %s12
      %p140 = scmp.lt.s32.totalorder %s12, 3
      %p141 = pnand %p139, %p140
      %p142 = pneg %p141
      // Predicated region
      $region29: #{tpu_custom_call.1} parent=5 // pred_check
        _
      $region30: #{tpu_custom_call.1} parent=5 // pred_check_branch
        %144 = sbr.rel (%p141) target = $region32
      $region31: #{tpu_custom_call.1} parent=5 // pred_region
        %s145 = ssub.s32 %s12, 1
        %p146 = scmp.lt.s32.totalorder %s17, 1
        %s147 = scalar_select %p146, %s17, 1
        %s148 = smul.addr %s147, 2
        %s149 = smul.addr %s148, 4
        %s150 = scalar_lea.vmem %s0, %s149
        %p151 = pneg %p38
        %p152 = pneg %p35
        %p153 = pneg %p59
        %p154 = pneg %p56
        %p155 = pneg %p80
        %p156 = pneg %p77
        %p157 = pneg %p106
        %p158 = pneg %p103
        %s159 = sand.u32 %s93, 1
        %s160 = scalar_lea.sflag [#allocation3], %s159
        %s161 = sand.u32 %s93, 1
        %s162 = smul.addr %s161, 8
        %s163 = scalar_lea.vmem [#allocation2], %s162
        %p164 = scmp.lt.s32.totalorder %s17, 1
        %s165 = scalar_select %p164, %s17, 1
        %s166 = smul.addr %s165, 2
        %s167 = smul.addr %s166, 4
        %s168 = scalar_lea.vmem %s0, %s167
        %v169 = vlaneseq
        %v170 = vand.u32 %v169, 127
        %v171 = vadd.s32 %v170, 128
        %vm172 = vcmp.lt.s32.totalorder %v170, 0
        %v173 = vsub.s32 0, %v170
        %v174 = vsel %vm172, %v173, %v170
        %v175 = vshrl.u32 %v174, 4
        %v176 = vand.u32 %v174, 15
        %v177 = vsub.s32 0, %v176
        %v178 = vsel %vm172, %v177, %v176
        %vm179 = vcmp.lt.s32.totalorder %v171, 0
        %v180 = vsub.s32 0, %v171
        %v181 = vsel %vm179, %v180, %v171
        %v182 = vshrl.u32 %v181, 4
        %v183 = vand.u32 %v181, 15
        %v184 = vsub.s32 0, %v183
        %v185 = vsel %vm179, %v184, %v183
        %vm186 = vcmp.ne.s32.totalorder %v178, 0
        %vm187 = vcmp.ne.s32.totalorder %v185, 0
        %vm188 = vcmp.lt.s32.totalorder %v178, 0
        %vm189 = vcmp.lt.s32.totalorder %v185, 0
        %vm190 = vmand %vm188, %vm186
        %vm191 = vmand %vm189, %vm187
        %v192 = vadd.s32 %v178, 16
        %v193 = vadd.s32 %v185, 16
        %v194 = vsel %vm190, %v192, %v178
        %v195 = vsel %vm191, %v193, %v185
        %vm196 = vcmp.lt.s32.totalorder %v170, 16
        %vm197 = vcmp.lt.s32.totalorder %v171, 16
        %vm198 = vcmp.ge.s32.totalorder %v170, 240
        %vm199 = vcmp.ge.s32.totalorder %v171, 240
        %vm200 = vcmp.eq.s32.totalorder %v194, 0
        %vm201 = vcmp.eq.s32.totalorder %v195, 0
        %vm202 = vcmp.eq.s32.totalorder %v194, 15
        %vm203 = vcmp.eq.s32.totalorder %v195, 15
        %v204 = vld [vmem:[%s168] sm:$0xff]
        %206 = vst [vmem:[#allocation1] ss:$2 sm:$0xff] %v204
        %v207 = vld.sshfl [vmem:[#allocation1] sm:$0xff pattern:$0x75316420]
        %v208 = vld.sshfl [vmem:[#allocation1 + $0x8] sm:$0xff pattern:$0x75316420]
        %211 = vrot.lane.b32.xlu0 %v207, 16
        %v212 = vpop.permute.xlu0 %211
        %213 = vrot.lane.b32.xlu0 %v208, 16
        %v214 = vpop.permute.xlu0 %213
        %v215 = vsel %vm196, %v212, %v214
        %v216 = vsel %vm196, %v214, %v212
        %217 = vst [vmem:[#allocation1] ss:$2 sm:$0xff] %v204
        %v218 = vld.sshfl [vmem:[#allocation1] sm:$0xff pattern:$0x75316420]
        %v219 = vld.sshfl [vmem:[#allocation1 + $0x8] sm:$0xff pattern:$0x75316420]
        %222 = vrot.lane.b32.xlu0 %v218, 112
        %v223 = vpop.permute.xlu0 %222
        %224 = vrot.lane.b32.xlu0 %v219, 112
        %v225 = vpop.permute.xlu0 %224
        %vm226 = vcmp.lt.s32.totalorder %v170, 112
        %v227 = vsel %vm226, %v223, %v225
        %v228 = vsel %vm226, %v225, %v223
        %v229 = vsel %vm196, 1, 0
        %v230 = vsel %vm197, 1, 0
        %vm231 = vcmp.eq.s32.totalorder %v229, 1
        %vm232 = vcmp.eq.s32.totalorder %v230, 1
        %v233 = vsel %vm231, %v227, %v216
        %v234 = vsel %vm232, %v228, %v215
        %v235 = vsel %vm198, 1, 0
        %v236 = vsel %vm199, 1, 0
        %vm237 = vcmp.eq.s32.totalorder %v235, 1
        %vm238 = vcmp.eq.s32.totalorder %v236, 1
        %v239 = vsel %vm237, %v216, %v227
        %v240 = vsel %vm238, %v215, %v228
        %241 = vrot.lane.b32.xlu0 %v233, 1
        %v242 = vpop.permute.xlu0 %241
        %243 = vrot.lane.b32.xlu0 %v234, 1
        %v244 = vpop.permute.xlu0 %243
        %vm245 = vcmp.lt.s32.totalorder %v170, 1
        %v246 = vsel %vm245, %v242, %v244
        %v247 = vsel %vm245, %v244, %v242
        %248 = vrot.lane.b32.xlu0 %v233, 127
        %v249 = vpop.permute.xlu0 %248
        %250 = vrot.lane.b32.xlu0 %v234, 127
        %v251 = vpop.permute.xlu0 %250
        %vm252 = vcmp.lt.s32.totalorder %v170, 127
        %v253 = vsel %vm252, %v249, %v251
        %v254 = vsel %vm252, %v251, %v249
        %v255 = vsel %vm200, 1, 0
        %v256 = vsel %vm201, 1, 0
        %vm257 = vcmp.eq.s32.totalorder %v255, 1
        %vm258 = vcmp.eq.s32.totalorder %v256, 1
        %v259 = vsel %vm257, %v253, %v247
        %v260 = vsel %vm258, %v254, %v246
        %v261 = vsel %vm202, 1, 0
        %v262 = vsel %vm203, 1, 0
        %vm263 = vcmp.eq.s32.totalorder %v261, 1
        %vm264 = vcmp.eq.s32.totalorder %v262, 1
        %v265 = vsel %vm263, %v247, %v253
        %v266 = vsel %vm264, %v246, %v254
        %v267 = vld [vmem:[%s1] sm:$0xf]
        %s268 = scalar_lea.vmem %s1, 4
        %v269 = vld [vmem:[%s268] sm:$0xf]
        %vm270 = vcmask 31744
        %v272 = vsel %vm270, %v269, 0
        %vm274 = vcmask 1043456
        %v276 = vsel %vm274, %v233, 0
        %v279 = vsel %vm274, %v234, 0
        %281 = vmatpush.msra.mxu0 0.0
        %282 = vmatpush.msra.mxu0 0.0
        %283 = vmatpush.msra.mxu0 0.0
        %284 = vmatpush.msra.mxu0 0.0
        %285 = vmatpush.msra.mxu0 0.0
        %286 = vmatpush.msra.mxu0 0.0
        %287 = vmatpush.msra.mxu0 0.0
        %288 = vmatpush.msra.mxu0 0.0
        %289 = vmatpush.msra.mxu0 0.0
        %290 = vmatpush.msra.mxu0 0.0
        %291 = vmatpush.msra.mxu0 0.0
        %292 = vmatpush.msra.mxu0 0.0
        %293 = vmatpush.msra.mxu0 0.0
        %294 = vmatpush.msra.mxu0 0.0
        %295 = vmatpush.msra.mxu0 0.0
        %296 = vmatpush.msra.mxu0 %v276
        %297 = vmatmul.f32.gmra.mxu0 %v272
        %v298 = vpop.f32.mrf.mxu0
        %v299 = vadd.f32 0.0, %v298
        %300 = vdwg.mxu0
        %301 = vmatpush.msra.mxu0 0.0
        %302 = vmatpush.msra.mxu0 0.0
        %303 = vmatpush.msra.mxu0 0.0
        %304 = vmatpush.msra.mxu0 0.0
        %305 = vmatpush.msra.mxu0 0.0
        %306 = vmatpush.msra.mxu0 0.0
        %307 = vmatpush.msra.mxu0 0.0
        %308 = vmatpush.msra.mxu0 0.0
        %309 = vmatpush.msra.mxu0 0.0
        %310 = vmatpush.msra.mxu0 0.0
        %311 = vmatpush.msra.mxu0 0.0
        %312 = vmatpush.msra.mxu0 0.0
        %313 = vmatpush.msra.mxu0 0.0
        %314 = vmatpush.msra.mxu0 0.0
        %315 = vmatpush.msra.mxu0 0.0
        %316 = vmatpush.msra.mxu0 %v279
        %317 = vmatmul.f32.gmra.mxu0 %v272
        %v318 = vpop.f32.mrf.mxu0
        %v319 = vadd.f32 0.0, %v318
        %320 = vdwg.mxu0
        %v322 = vsel %vm270, %v267, 0
        %v325 = vsel %vm274, %v259, 0
        %v328 = vsel %vm274, %v260, 0
        %330 = vmatpush.msra.mxu0 0.0
        %331 = vmatpush.msra.mxu0 0.0
        %332 = vmatpush.msra.mxu0 0.0
        %333 = vmatpush.msra.mxu0 0.0
        %334 = vmatpush.msra.mxu0 0.0
        %335 = vmatpush.msra.mxu0 0.0
        %336 = vmatpush.msra.mxu0 0.0
        %337 = vmatpush.msra.mxu0 0.0
        %338 = vmatpush.msra.mxu0 0.0
        %339 = vmatpush.msra.mxu0 0.0
        %340 = vmatpush.msra.mxu0 0.0
        %341 = vmatpush.msra.mxu0 0.0
        %342 = vmatpush.msra.mxu0 0.0
        %343 = vmatpush.msra.mxu0 0.0
        %344 = vmatpush.msra.mxu0 0.0
        %345 = vmatpush.msra.mxu0 %v325
        %346 = vmatmul.f32.gmra.mxu0 %v322
        %v347 = vpop.f32.mrf.mxu0
        %v348 = vadd.f32 %v299, %v347
        %349 = vdwg.mxu0
        %350 = vmatpush.msra.mxu0 0.0
        %351 = vmatpush.msra.mxu0 0.0
        %352 = vmatpush.msra.mxu0 0.0
        %353 = vmatpush.msra.mxu0 0.0
        %354 = vmatpush.msra.mxu0 0.0
        %355 = vmatpush.msra.mxu0 0.0
        %356 = vmatpush.msra.mxu0 0.0
        %357 = vmatpush.msra.mxu0 0.0
        %358 = vmatpush.msra.mxu0 0.0
        %359 = vmatpush.msra.mxu0 0.0
        %360 = vmatpush.msra.mxu0 0.0
        %361 = vmatpush.msra.mxu0 0.0
        %362 = vmatpush.msra.mxu0 0.0
        %363 = vmatpush.msra.mxu0 0.0
        %364 = vmatpush.msra.mxu0 0.0
        %365 = vmatpush.msra.mxu0 %v328
        %366 = vmatmul.f32.gmra.mxu0 %v322
        %v367 = vpop.f32.mrf.mxu0
        %v368 = vadd.f32 %v319, %v367
        %369 = vdwg.mxu0
        %s370 = scalar_lea.vmem %s1, 8
        %v371 = vld [vmem:[%s370] sm:$0xf]
        %v373 = vsel %vm270, %v371, 0
        %v376 = vsel %vm274, %v265, 0
        %v379 = vsel %vm274, %v266, 0
        %381 = vmatpush.msra.mxu0 0.0
        %382 = vmatpush.msra.mxu0 0.0
        %383 = vmatpush.msra.mxu0 0.0
        %384 = vmatpush.msra.mxu0 0.0
        %385 = vmatpush.msra.mxu0 0.0
        %386 = vmatpush.msra.mxu0 0.0
        %387 = vmatpush.msra.mxu0 0.0
        %388 = vmatpush.msra.mxu0 0.0
        %389 = vmatpush.msra.mxu0 0.0
        %390 = vmatpush.msra.mxu0 0.0
        %391 = vmatpush.msra.mxu0 0.0
        %392 = vmatpush.msra.mxu0 0.0
        %393 = vmatpush.msra.mxu0 0.0
        %394 = vmatpush.msra.mxu0 0.0
        %395 = vmatpush.msra.mxu0 0.0
        %396 = vmatpush.msra.mxu0 %v376
        %397 = vmatmul.f32.gmra.mxu0 %v373
        %v398 = vpop.f32.mrf.mxu0
        %v399 = vadd.f32 0.0, %v398
        %400 = vdwg.mxu0
        %401 = vmatpush.msra.mxu0 0.0
        %402 = vmatpush.msra.mxu0 0.0
        %403 = vmatpush.msra.mxu0 0.0
        %404 = vmatpush.msra.mxu0 0.0
        %405 = vmatpush.msra.mxu0 0.0
        %406 = vmatpush.msra.mxu0 0.0
        %407 = vmatpush.msra.mxu0 0.0
        %408 = vmatpush.msra.mxu0 0.0
        %409 = vmatpush.msra.mxu0 0.0
        %410 = vmatpush.msra.mxu0 0.0
        %411 = vmatpush.msra.mxu0 0.0
        %412 = vmatpush.msra.mxu0 0.0
        %413 = vmatpush.msra.mxu0 0.0
        %414 = vmatpush.msra.mxu0 0.0
        %415 = vmatpush.msra.mxu0 0.0
        %416 = vmatpush.msra.mxu0 %v379
        %417 = vmatmul.f32.gmra.mxu0 %v373
        %v418 = vpop.f32.mrf.mxu0
        %v419 = vadd.f32 0.0, %v418
        %420 = vdwg.mxu0
        %v421 = vadd.f32 %v348, %v399
        %v422 = vadd.f32 %v368, %v419
        %423 = vst [vmem:[#allocation1] ss:$2 sm:$0xff] %v204
        %v424 = vld.sshfl [vmem:[#allocation1] sm:$0xff pattern:$0x75316420]
        %v425 = vld.sshfl [vmem:[#allocation1 + $0x8] sm:$0xff pattern:$0x75316420]
        %428 = vrot.lane.b32.xlu0 %v424, 1
        %v429 = vpop.permute.xlu0 %428
        %430 = vrot.lane.b32.xlu0 %v425, 1
        %v431 = vpop.permute.xlu0 %430
        %v432 = vsel %vm245, %v429, %v431
        %v433 = vsel %vm245, %v431, %v429
        %434 = vst [vmem:[#allocation1] ss:$2 sm:$0xff] %v204
        %v435 = vld.sshfl [vmem:[#allocation1] sm:$0xff pattern:$0x75316420]
        %v436 = vld.sshfl [vmem:[#allocation1 + $0x8] sm:$0xff pattern:$0x75316420]
        %439 = vrot.lane.b32.xlu0 %v435, 127
        %v440 = vpop.permute.xlu0 %439
        %441 = vrot.lane.b32.xlu0 %v436, 127
        %v442 = vpop.permute.xlu0 %441
        %v443 = vsel %vm252, %v440, %v442
        %v444 = vsel %vm252, %v442, %v440
        %v445 = vsel %vm257, %v443, %v433
        %v446 = vsel %vm258, %v444, %v432
        %v447 = vsel %vm263, %v433, %v443
        %v448 = vsel %vm264, %v432, %v444
        %s449 = scalar_lea.vmem %s1, 12
        %v450 = vld [vmem:[%s449] sm:$0xf]
        %v452 = vsel %vm270, %v450, 0
        %v455 = vsel %vm274, %v445, 0
        %v458 = vsel %vm274, %v446, 0
        %460 = vmatpush.msra.mxu0 0.0
        %461 = vmatpush.msra.mxu0 0.0
        %462 = vmatpush.msra.mxu0 0.0
        %463 = vmatpush.msra.mxu0 0.0
        %464 = vmatpush.msra.mxu0 0.0
        %465 = vmatpush.msra.mxu0 0.0
        %466 = vmatpush.msra.mxu0 0.0
        %467 = vmatpush.msra.mxu0 0.0
        %468 = vmatpush.msra.mxu0 0.0
        %469 = vmatpush.msra.mxu0 0.0
        %470 = vmatpush.msra.mxu0 0.0
        %471 = vmatpush.msra.mxu0 0.0
        %472 = vmatpush.msra.mxu0 0.0
        %473 = vmatpush.msra.mxu0 0.0
        %474 = vmatpush.msra.mxu0 0.0
        %475 = vmatpush.msra.mxu0 %v455
        %476 = vmatmul.f32.gmra.mxu0 %v452
        %v477 = vpop.f32.mrf.mxu0
        %v478 = vadd.f32 0.0, %v477
        %479 = vdwg.mxu0
        %480 = vmatpush.msra.mxu0 0.0
        %481 = vmatpush.msra.mxu0 0.0
        %482 = vmatpush.msra.mxu0 0.0
        %483 = vmatpush.msra.mxu0 0.0
        %484 = vmatpush.msra.mxu0 0.0
        %485 = vmatpush.msra.mxu0 0.0
        %486 = vmatpush.msra.mxu0 0.0
        %487 = vmatpush.msra.mxu0 0.0
        %488 = vmatpush.msra.mxu0 0.0
        %489 = vmatpush.msra.mxu0 0.0
        %490 = vmatpush.msra.mxu0 0.0
        %491 = vmatpush.msra.mxu0 0.0
        %492 = vmatpush.msra.mxu0 0.0
        %493 = vmatpush.msra.mxu0 0.0
        %494 = vmatpush.msra.mxu0 0.0
        %495 = vmatpush.msra.mxu0 %v458
        %496 = vmatmul.f32.gmra.mxu0 %v452
        %v497 = vpop.f32.mrf.mxu0
        %v498 = vadd.f32 0.0, %v497
        %499 = vdwg.mxu0
        %v500 = vadd.f32 %v421, %v478
        %v501 = vadd.f32 %v422, %v498
        %s502 = scalar_lea.vmem %s1, 16
        %v503 = vld [vmem:[%s502] sm:$0xf]
        %504 = vst [vmem:[#allocation1] ss:$2 sm:$0xff] %v204
        %v505 = vld.sshfl [vmem:[#allocation1] sm:$0xff pattern:$0x75316420]
        %v506 = vld.sshfl [vmem:[#allocation1 + $0x8] sm:$0xff pattern:$0x75316420]
        %v508 = vsel %vm270, %v503, 0
        %v510 = vsel %vm274, %v505, 0
        %v512 = vsel %vm274, %v506, 0
        %514 = vmatpush.msra.mxu0 0.0
        %515 = vmatpush.msra.mxu0 0.0
        %516 = vmatpush.msra.mxu0 0.0
        %517 = vmatpush.msra.mxu0 0.0
        %518 = vmatpush.msra.mxu0 0.0
        %519 = vmatpush.msra.mxu0 0.0
        %520 = vmatpush.msra.mxu0 0.0
        %521 = vmatpush.msra.mxu0 0.0
        %522 = vmatpush.msra.mxu0 0.0
        %523 = vmatpush.msra.mxu0 0.0
        %524 = vmatpush.msra.mxu0 0.0
        %525 = vmatpush.msra.mxu0 0.0
        %526 = vmatpush.msra.mxu0 0.0
        %527 = vmatpush.msra.mxu0 0.0
        %528 = vmatpush.msra.mxu0 0.0
        %529 = vmatpush.msra.mxu0 %v510
        %530 = vmatmul.f32.gmra.mxu0 %v508
        %v531 = vpop.f32.mrf.mxu0
        %v532 = vadd.f32 0.0, %v531
        %533 = vdwg.mxu0
        %534 = vmatpush.msra.mxu0 0.0
        %535 = vmatpush.msra.mxu0 0.0
        %536 = vmatpush.msra.mxu0 0.0
        %537 = vmatpush.msra.mxu0 0.0
        %538 = vmatpush.msra.mxu0 0.0
        %539 = vmatpush.msra.mxu0 0.0
        %540 = vmatpush.msra.mxu0 0.0
        %541 = vmatpush.msra.mxu0 0.0
        %542 = vmatpush.msra.mxu0 0.0
        %543 = vmatpush.msra.mxu0 0.0
        %544 = vmatpush.msra.mxu0 0.0
        %545 = vmatpush.msra.mxu0 0.0
        %546 = vmatpush.msra.mxu0 0.0
        %547 = vmatpush.msra.mxu0 0.0
        %548 = vmatpush.msra.mxu0 0.0
        %549 = vmatpush.msra.mxu0 %v512
        %550 = vmatmul.f32.gmra.mxu0 %v508
        %v551 = vpop.f32.mrf.mxu0
        %v552 = vadd.f32 0.0, %v551
        %553 = vdwg.mxu0
        %v554 = vadd.f32 %v500, %v532
        %v555 = vadd.f32 %v501, %v552
        %s556 = scalar_lea.vmem %s1, 20
        %v557 = vld [vmem:[%s556] sm:$0xf]
        %v559 = vsel %vm270, %v557, 0
        %v562 = vsel %vm274, %v447, 0
        %v565 = vsel %vm274, %v448, 0
        %567 = vmatpush.msra.mxu0 0.0
        %568 = vmatpush.msra.mxu0 0.0
        %569 = vmatpush.msra.mxu0 0.0
        %570 = vmatpush.msra.mxu0 0.0
        %571 = vmatpush.msra.mxu0 0.0
        %572 = vmatpush.msra.mxu0 0.0
        %573 = vmatpush.msra.mxu0 0.0
        %574 = vmatpush.msra.mxu0 0.0
        %575 = vmatpush.msra.mxu0 0.0
        %576 = vmatpush.msra.mxu0 0.0
        %577 = vmatpush.msra.mxu0 0.0
        %578 = vmatpush.msra.mxu0 0.0
        %579 = vmatpush.msra.mxu0 0.0
        %580 = vmatpush.msra.mxu0 0.0
        %581 = vmatpush.msra.mxu0 0.0
        %582 = vmatpush.msra.mxu0 %v562
        %583 = vmatmul.f32.gmra.mxu0 %v559
        %v584 = vpop.f32.mrf.mxu0
        %v585 = vadd.f32 0.0, %v584
        %586 = vdwg.mxu0
        %587 = vmatpush.msra.mxu0 0.0
        %588 = vmatpush.msra.mxu0 0.0
        %589 = vmatpush.msra.mxu0 0.0
        %590 = vmatpush.msra.mxu0 0.0
        %591 = vmatpush.msra.mxu0 0.0
        %592 = vmatpush.msra.mxu0 0.0
        %593 = vmatpush.msra.mxu0 0.0
        %594 = vmatpush.msra.mxu0 0.0
        %595 = vmatpush.msra.mxu0 0.0
        %596 = vmatpush.msra.mxu0 0.0
        %597 = vmatpush.msra.mxu0 0.0
        %598 = vmatpush.msra.mxu0 0.0
        %599 = vmatpush.msra.mxu0 0.0
        %600 = vmatpush.msra.mxu0 0.0
        %601 = vmatpush.msra.mxu0 0.0
        %602 = vmatpush.msra.mxu0 %v565
        %603 = vmatmul.f32.gmra.mxu0 %v559
        %v604 = vpop.f32.mrf.mxu0
        %v605 = vadd.f32 0.0, %v604
        %606 = vdwg.mxu0
        %v607 = vadd.f32 %v554, %v585
        %v608 = vadd.f32 %v555, %v605
        %609 = vrot.lane.b32.xlu0 %v239, 1
        %v610 = vpop.permute.xlu0 %609
        %611 = vrot.lane.b32.xlu0 %v240, 1
        %v612 = vpop.permute.xlu0 %611
        %v613 = vsel %vm245, %v610, %v612
        %v614 = vsel %vm245, %v612, %v610
        %615 = vrot.lane.b32.xlu0 %v239, 127
        %v616 = vpop.permute.xlu0 %615
        %617 = vrot.lane.b32.xlu0 %v240, 127
        %v618 = vpop.permute.xlu0 %617
        %v619 = vsel %vm252, %v616, %v618
        %v620 = vsel %vm252, %v618, %v616
        %v621 = vsel %vm257, %v619, %v614
        %v622 = vsel %vm258, %v620, %v613
        %v623 = vsel %vm263, %v614, %v619
        %v624 = vsel %vm264, %v613, %v620
        %s625 = scalar_lea.vmem %s1, 24
        %v626 = vld [vmem:[%s625] sm:$0xf]
        %v628 = vsel %vm270, %v626, 0
        %v631 = vsel %vm274, %v621, 0
        %v634 = vsel %vm274, %v622, 0
        %636 = vmatpush.msra.mxu0 0.0
        %637 = vmatpush.msra.mxu0 0.0
        %638 = vmatpush.msra.mxu0 0.0
        %639 = vmatpush.msra.mxu0 0.0
        %640 = vmatpush.msra.mxu0 0.0
        %641 = vmatpush.msra.mxu0 0.0
        %642 = vmatpush.msra.mxu0 0.0
        %643 = vmatpush.msra.mxu0 0.0
        %644 = vmatpush.msra.mxu0 0.0
        %645 = vmatpush.msra.mxu0 0.0
        %646 = vmatpush.msra.mxu0 0.0
        %647 = vmatpush.msra.mxu0 0.0
        %648 = vmatpush.msra.mxu0 0.0
        %649 = vmatpush.msra.mxu0 0.0
        %650 = vmatpush.msra.mxu0 0.0
        %651 = vmatpush.msra.mxu0 %v631
        %652 = vmatmul.f32.gmra.mxu0 %v628
        %v653 = vpop.f32.mrf.mxu0
        %v654 = vadd.f32 0.0, %v653
        %655 = vdwg.mxu0
        %656 = vmatpush.msra.mxu0 0.0
        %657 = vmatpush.msra.mxu0 0.0
        %658 = vmatpush.msra.mxu0 0.0
        %659 = vmatpush.msra.mxu0 0.0
        %660 = vmatpush.msra.mxu0 0.0
        %661 = vmatpush.msra.mxu0 0.0
        %662 = vmatpush.msra.mxu0 0.0
        %663 = vmatpush.msra.mxu0 0.0
        %664 = vmatpush.msra.mxu0 0.0
        %665 = vmatpush.msra.mxu0 0.0
        %666 = vmatpush.msra.mxu0 0.0
        %667 = vmatpush.msra.mxu0 0.0
        %668 = vmatpush.msra.mxu0 0.0
        %669 = vmatpush.msra.mxu0 0.0
        %670 = vmatpush.msra.mxu0 0.0
        %671 = vmatpush.msra.mxu0 %v634
        %672 = vmatmul.f32.gmra.mxu0 %v628
        %v673 = vpop.f32.mrf.mxu0
        %v674 = vadd.f32 0.0, %v673
        %675 = vdwg.mxu0
        %v676 = vadd.f32 %v607, %v654
        %v677 = vadd.f32 %v608, %v674
        %s678 = scalar_lea.vmem %s1, 28
        %v679 = vld [vmem:[%s678] sm:$0xf]
        %v681 = vsel %vm270, %v679, 0
        %v684 = vsel %vm274, %v239, 0
        %v687 = vsel %vm274, %v240, 0
        %689 = vmatpush.msra.mxu0 0.0
        %690 = vmatpush.msra.mxu0 0.0
        %691 = vmatpush.msra.mxu0 0.0
        %692 = vmatpush.msra.mxu0 0.0
        %693 = vmatpush.msra.mxu0 0.0
        %694 = vmatpush.msra.mxu0 0.0
        %695 = vmatpush.msra.mxu0 0.0
        %696 = vmatpush.msra.mxu0 0.0
        %697 = vmatpush.msra.mxu0 0.0
        %698 = vmatpush.msra.mxu0 0.0
        %699 = vmatpush.msra.mxu0 0.0
        %700 = vmatpush.msra.mxu0 0.0
        %701 = vmatpush.msra.mxu0 0.0
        %702 = vmatpush.msra.mxu0 0.0
        %703 = vmatpush.msra.mxu0 0.0
        %704 = vmatpush.msra.mxu0 %v684
        %705 = vmatmul.f32.gmra.mxu0 %v681
        %v706 = vpop.f32.mrf.mxu0
        %v707 = vadd.f32 0.0, %v706
        %708 = vdwg.mxu0
        %709 = vmatpush.msra.mxu0 0.0
        %710 = vmatpush.msra.mxu0 0.0
        %711 = vmatpush.msra.mxu0 0.0
        %712 = vmatpush.msra.mxu0 0.0
        %713 = vmatpush.msra.mxu0 0.0
        %714 = vmatpush.msra.mxu0 0.0
        %715 = vmatpush.msra.mxu0 0.0
        %716 = vmatpush.msra.mxu0 0.0
        %717 = vmatpush.msra.mxu0 0.0
        %718 = vmatpush.msra.mxu0 0.0
        %719 = vmatpush.msra.mxu0 0.0
        %720 = vmatpush.msra.mxu0 0.0
        %721 = vmatpush.msra.mxu0 0.0
        %722 = vmatpush.msra.mxu0 0.0
        %723 = vmatpush.msra.mxu0 0.0
        %724 = vmatpush.msra.mxu0 %v687
        %725 = vmatmul.f32.gmra.mxu0 %v681
        %v726 = vpop.f32.mrf.mxu0
        %v727 = vadd.f32 0.0, %v726
        %728 = vdwg.mxu0
        %v729 = vadd.f32 %v676, %v707
        %v730 = vadd.f32 %v677, %v727
        %s731 = scalar_lea.vmem %s1, 32
        %v732 = vld [vmem:[%s731] sm:$0xf]
        %v734 = vsel %vm270, %v732, 0
        %v737 = vsel %vm274, %v623, 0
        %v740 = vsel %vm274, %v624, 0
        %742 = vmatpush.msra.mxu0 0.0
        %743 = vmatpush.msra.mxu0 0.0
        %744 = vmatpush.msra.mxu0 0.0
        %745 = vmatpush.msra.mxu0 0.0
        %746 = vmatpush.msra.mxu0 0.0
        %747 = vmatpush.msra.mxu0 0.0
        %748 = vmatpush.msra.mxu0 0.0
        %749 = vmatpush.msra.mxu0 0.0
        %750 = vmatpush.msra.mxu0 0.0
        %751 = vmatpush.msra.mxu0 0.0
        %752 = vmatpush.msra.mxu0 0.0
        %753 = vmatpush.msra.mxu0 0.0
        %754 = vmatpush.msra.mxu0 0.0
        %755 = vmatpush.msra.mxu0 0.0
        %756 = vmatpush.msra.mxu0 0.0
        %757 = vmatpush.msra.mxu0 %v737
        %758 = vmatmul.f32.gmra.mxu0 %v734
        %v759 = vpop.f32.mrf.mxu0
        %v760 = vadd.f32 0.0, %v759
        %761 = vdwg.mxu0
        %762 = vmatpush.msra.mxu0 0.0
        %763 = vmatpush.msra.mxu0 0.0
        %764 = vmatpush.msra.mxu0 0.0
        %765 = vmatpush.msra.mxu0 0.0
        %766 = vmatpush.msra.mxu0 0.0
        %767 = vmatpush.msra.mxu0 0.0
        %768 = vmatpush.msra.mxu0 0.0
        %769 = vmatpush.msra.mxu0 0.0
        %770 = vmatpush.msra.mxu0 0.0
        %771 = vmatpush.msra.mxu0 0.0
        %772 = vmatpush.msra.mxu0 0.0
        %773 = vmatpush.msra.mxu0 0.0
        %774 = vmatpush.msra.mxu0 0.0
        %775 = vmatpush.msra.mxu0 0.0
        %776 = vmatpush.msra.mxu0 0.0
        %777 = vmatpush.msra.mxu0 %v740
        %778 = vmatmul.f32.gmra.mxu0 %v734
        %v779 = vpop.f32.mrf.mxu0
        %v780 = vadd.f32 0.0, %v779
        %781 = vdwg.mxu0
        %v782 = vadd.f32 %v729, %v760
        %v783 = vadd.f32 %v730, %v780
        %v784 = vsel %vm274, %v782, 0.0
        %v785 = vsel %vm274, %v783, 0.0
        %v786 = vadd.f32 %v784, %v785
        %787 = vadd.xlane.f32.xlu0 %v786
        %v788 = vpop.xlane.xlu0 %787
        %v789 = vrcp.pop 256.0
        %v790 = vmul.f32 256.0, %v789
        %v791 = vsub.f32 1.0, %v790
        %v792 = vmul.f32 %v789, %v791
        %v793 = vadd.f32 %v789, %v792
        %vm794 = vweird.f32 %v789
        %v795 = vsel %vm794, %v789, %v793
        %v796 = vmul.f32 %v788, %v795
        %v797 = vsub.f32 %v782, %v796
        %v798 = vsub.f32 %v783, %v796
        %v799 = vmul.f32 %v797, %v797
        %v800 = vmul.f32 %v798, %v798
        %v801 = vsel %vm274, %v799, 0.0
        %v802 = vsel %vm274, %v800, 0.0
        %v803 = vadd.f32 %v801, %v802
        %804 = vadd.xlane.f32.xlu0 %v803
        %v805 = vpop.xlane.xlu0 %804
        %v806 = vmul.f32 %v805, %v795
        %v807 = vadd.f32 %v806, 1e-05
        %v808 = vrsqrt.pop %v807
        %v809 = vmul.f32 %v808, %v807
        %v810 = vmul.f32 %v809, %v808
        %v811 = vmul.f32 0.5, %v810
        %v812 = vsub.f32 1.5, %v811
        %v813 = vmul.f32 %v808, %v812
        %vm814 = vweird.f32 %v807
        %vm815 = vweird.f32 %v808
        %vm816 = vmor %vm814, %vm815
        %v817 = vsel %vm816, %v808, %v813
        %v818 = vmul.f32 %v797, %v817
        %v819 = vmul.f32 %v798, %v817
        %v820 = vmax.f32 %v818, 0.0
        %v821 = vmax.f32 %v819, 0.0
        %822 = vrot.lane.b32.xlu0 %v820, 16
        %v823 = vpop.permute.xlu0 %822
        %824 = vrot.lane.b32.xlu0 %v821, 16
        %v825 = vpop.permute.xlu0 %824
        %v826 = vsel %vm196, %v823, %v825
        %v827 = vsel %vm196, %v825, %v823
        %828 = vrot.lane.b32.xlu0 %v820, 112
        %v829 = vpop.permute.xlu0 %828
        %830 = vrot.lane.b32.xlu0 %v821, 112
        %v831 = vpop.permute.xlu0 %830
        %v832 = vsel %vm226, %v829, %v831
        %v833 = vsel %vm226, %v831, %v829
        %v834 = vsel %vm231, %v832, %v827
        %v835 = vsel %vm232, %v833, %v826
        %v836 = vsel %vm237, %v827, %v832
        %v837 = vsel %vm238, %v826, %v833
        %838 = vrot.lane.b32.xlu0 %v834, 1
        %v839 = vpop.permute.xlu0 %838
        %840 = vrot.lane.b32.xlu0 %v835, 1
        %v841 = vpop.permute.xlu0 %840
        %v842 = vsel %vm245, %v839, %v841
        %v843 = vsel %vm245, %v841, %v839
        %844 = vrot.lane.b32.xlu0 %v834, 127
        %v845 = vpop.permute.xlu0 %844
        %846 = vrot.lane.b32.xlu0 %v835, 127
        %v847 = vpop.permute.xlu0 %846
        %v848 = vsel %vm252, %v845, %v847
        %v849 = vsel %vm252, %v847, %v845
        %v850 = vsel %vm257, %v848, %v843
        %v851 = vsel %vm258, %v849, %v842
        %v852 = vsel %vm263, %v843, %v848
        %v853 = vsel %vm264, %v842, %v849
        %v854 = vld [vmem:[%s2] sm:$0xf]
        %s855 = scalar_lea.vmem %s2, 4
        %v856 = vld [vmem:[%s855] sm:$0xf]
        %v858 = vsel %vm270, %v856, 0
        %v861 = vsel %vm274, %v834, 0
        %v864 = vsel %vm274, %v835, 0
        %866 = vmatpush.msra.mxu0 0.0
        %867 = vmatpush.msra.mxu0 0.0
        %868 = vmatpush.msra.mxu0 0.0
        %869 = vmatpush.msra.mxu0 0.0
        %870 = vmatpush.msra.mxu0 0.0
        %871 = vmatpush.msra.mxu0 0.0
        %872 = vmatpush.msra.mxu0 0.0
        %873 = vmatpush.msra.mxu0 0.0
        %874 = vmatpush.msra.mxu0 0.0
        %875 = vmatpush.msra.mxu0 0.0
        %876 = vmatpush.msra.mxu0 0.0
        %877 = vmatpush.msra.mxu0 0.0
        %878 = vmatpush.msra.mxu0 0.0
        %879 = vmatpush.msra.mxu0 0.0
        %880 = vmatpush.msra.mxu0 0.0
        %881 = vmatpush.msra.mxu0 %v861
        %882 = vmatmul.f32.gmra.mxu0 %v858
        %v883 = vpop.f32.mrf.mxu0
        %v884 = vadd.f32 0.0, %v883
        %885 = vdwg.mxu0
        %886 = vmatpush.msra.mxu0 0.0
        %887 = vmatpush.msra.mxu0 0.0
        %888 = vmatpush.msra.mxu0 0.0
        %889 = vmatpush.msra.mxu0 0.0
        %890 = vmatpush.msra.mxu0 0.0
        %891 = vmatpush.msra.mxu0 0.0
        %892 = vmatpush.msra.mxu0 0.0
        %893 = vmatpush.msra.mxu0 0.0
        %894 = vmatpush.msra.mxu0 0.0
        %895 = vmatpush.msra.mxu0 0.0
        %896 = vmatpush.msra.mxu0 0.0
        %897 = vmatpush.msra.mxu0 0.0
        %898 = vmatpush.msra.mxu0 0.0
        %899 = vmatpush.msra.mxu0 0.0
        %900 = vmatpush.msra.mxu0 0.0
        %901 = vmatpush.msra.mxu0 %v864
        %902 = vmatmul.f32.gmra.mxu0 %v858
        %v903 = vpop.f32.mrf.mxu0
        %v904 = vadd.f32 0.0, %v903
        %905 = vdwg.mxu0
        %v907 = vsel %vm270, %v854, 0
        %v910 = vsel %vm274, %v850, 0
        %v913 = vsel %vm274, %v851, 0
        %915 = vmatpush.msra.mxu0 0.0
        %916 = vmatpush.msra.mxu0 0.0
        %917 = vmatpush.msra.mxu0 0.0
        %918 = vmatpush.msra.mxu0 0.0
        %919 = vmatpush.msra.mxu0 0.0
        %920 = vmatpush.msra.mxu0 0.0
        %921 = vmatpush.msra.mxu0 0.0
        %922 = vmatpush.msra.mxu0 0.0
        %923 = vmatpush.msra.mxu0 0.0
        %924 = vmatpush.msra.mxu0 0.0
        %925 = vmatpush.msra.mxu0 0.0
        %926 = vmatpush.msra.mxu0 0.0
        %927 = vmatpush.msra.mxu0 0.0
        %928 = vmatpush.msra.mxu0 0.0
        %929 = vmatpush.msra.mxu0 0.0
        %930 = vmatpush.msra.mxu0 %v910
        %931 = vmatmul.f32.gmra.mxu0 %v907
        %v932 = vpop.f32.mrf.mxu0
        %v933 = vadd.f32 %v884, %v932
        %934 = vdwg.mxu0
        %935 = vmatpush.msra.mxu0 0.0
        %936 = vmatpush.msra.mxu0 0.0
        %937 = vmatpush.msra.mxu0 0.0
        %938 = vmatpush.msra.mxu0 0.0
        %939 = vmatpush.msra.mxu0 0.0
        %940 = vmatpush.msra.mxu0 0.0
        %941 = vmatpush.msra.mxu0 0.0
        %942 = vmatpush.msra.mxu0 0.0
        %943 = vmatpush.msra.mxu0 0.0
        %944 = vmatpush.msra.mxu0 0.0
        %945 = vmatpush.msra.mxu0 0.0
        %946 = vmatpush.msra.mxu0 0.0
        %947 = vmatpush.msra.mxu0 0.0
        %948 = vmatpush.msra.mxu0 0.0
        %949 = vmatpush.msra.mxu0 0.0
        %950 = vmatpush.msra.mxu0 %v913
        %951 = vmatmul.f32.gmra.mxu0 %v907
        %v952 = vpop.f32.mrf.mxu0
        %v953 = vadd.f32 %v904, %v952
        %954 = vdwg.mxu0
        %s955 = scalar_lea.vmem %s2, 8
        %v956 = vld [vmem:[%s955] sm:$0xf]
        %v958 = vsel %vm270, %v956, 0
        %v961 = vsel %vm274, %v852, 0
        %v964 = vsel %vm274, %v853, 0
        %966 = vmatpush.msra.mxu0 0.0
        %967 = vmatpush.msra.mxu0 0.0
        %968 = vmatpush.msra.mxu0 0.0
        %969 = vmatpush.msra.mxu0 0.0
        %970 = vmatpush.msra.mxu0 0.0
        %971 = vmatpush.msra.mxu0 0.0
        %972 = vmatpush.msra.mxu0 0.0
        %973 = vmatpush.msra.mxu0 0.0
        %974 = vmatpush.msra.mxu0 0.0
        %975 = vmatpush.msra.mxu0 0.0
        %976 = vmatpush.msra.mxu0 0.0
        %977 = vmatpush.msra.mxu0 0.0
        %978 = vmatpush.msra.mxu0 0.0
        %979 = vmatpush.msra.mxu0 0.0
        %980 = vmatpush.msra.mxu0 0.0
        %981 = vmatpush.msra.mxu0 %v961
        %982 = vmatmul.f32.gmra.mxu0 %v958
        %v983 = vpop.f32.mrf.mxu0
        %v984 = vadd.f32 0.0, %v983
        %985 = vdwg.mxu0
        %986 = vmatpush.msra.mxu0 0.0
        %987 = vmatpush.msra.mxu0 0.0
        %988 = vmatpush.msra.mxu0 0.0
        %989 = vmatpush.msra.mxu0 0.0
        %990 = vmatpush.msra.mxu0 0.0
        %991 = vmatpush.msra.mxu0 0.0
        %992 = vmatpush.msra.mxu0 0.0
        %993 = vmatpush.msra.mxu0 0.0
        %994 = vmatpush.msra.mxu0 0.0
        %995 = vmatpush.msra.mxu0 0.0
        %996 = vmatpush.msra.mxu0 0.0
        %997 = vmatpush.msra.mxu0 0.0
        %998 = vmatpush.msra.mxu0 0.0
        %999 = vmatpush.msra.mxu0 0.0
        %1000 = vmatpush.msra.mxu0 0.0
        %1001 = vmatpush.msra.mxu0 %v964
        %1002 = vmatmul.f32.gmra.mxu0 %v958
        %v1003 = vpop.f32.mrf.mxu0
        %v1004 = vadd.f32 0.0, %v1003
        %1005 = vdwg.mxu0
        %v1006 = vadd.f32 %v933, %v984
        %v1007 = vadd.f32 %v953, %v1004
        %1008 = vrot.lane.b32.xlu0 %v820, 1
        %v1009 = vpop.permute.xlu0 %1008
        %1010 = vrot.lane.b32.xlu0 %v821, 1
        %v1011 = vpop.permute.xlu0 %1010
        %v1012 = vsel %vm245, %v1009, %v1011
        %v1013 = vsel %vm245, %v1011, %v1009
        %1014 = vrot.lane.b32.xlu0 %v820, 127
        %v1015 = vpop.permute.xlu0 %1014
        %1016 = vrot.lane.b32.xlu0 %v821, 127
        %v1017 = vpop.permute.xlu0 %1016
        %v1018 = vsel %vm252, %v1015, %v1017
        %v1019 = vsel %vm252, %v1017, %v1015
        %v1020 = vsel %vm257, %v1018, %v1013
        %v1021 = vsel %vm258, %v1019, %v1012
        %v1022 = vsel %vm263, %v1013, %v1018
        %v1023 = vsel %vm264, %v1012, %v1019
        %s1024 = scalar_lea.vmem %s2, 12
        %v1025 = vld [vmem:[%s1024] sm:$0xf]
        %v1027 = vsel %vm270, %v1025, 0
        %v1030 = vsel %vm274, %v1020, 0
        %v1033 = vsel %vm274, %v1021, 0
        %1035 = vmatpush.msra.mxu0 0.0
        %1036 = vmatpush.msra.mxu0 0.0
        %1037 = vmatpush.msra.mxu0 0.0
        %1038 = vmatpush.msra.mxu0 0.0
        %1039 = vmatpush.msra.mxu0 0.0
        %1040 = vmatpush.msra.mxu0 0.0
        %1041 = vmatpush.msra.mxu0 0.0
        %1042 = vmatpush.msra.mxu0 0.0
        %1043 = vmatpush.msra.mxu0 0.0
        %1044 = vmatpush.msra.mxu0 0.0
        %1045 = vmatpush.msra.mxu0 0.0
        %1046 = vmatpush.msra.mxu0 0.0
        %1047 = vmatpush.msra.mxu0 0.0
        %1048 = vmatpush.msra.mxu0 0.0
        %1049 = vmatpush.msra.mxu0 0.0
        %1050 = vmatpush.msra.mxu0 %v1030
        %1051 = vmatmul.f32.gmra.mxu0 %v1027
        %v1052 = vpop.f32.mrf.mxu0
        %v1053 = vadd.f32 0.0, %v1052
        %1054 = vdwg.mxu0
        %1055 = vmatpush.msra.mxu0 0.0
        %1056 = vmatpush.msra.mxu0 0.0
        %1057 = vmatpush.msra.mxu0 0.0
        %1058 = vmatpush.msra.mxu0 0.0
        %1059 = vmatpush.msra.mxu0 0.0
        %1060 = vmatpush.msra.mxu0 0.0
        %1061 = vmatpush.msra.mxu0 0.0
        %1062 = vmatpush.msra.mxu0 0.0
        %1063 = vmatpush.msra.mxu0 0.0
        %1064 = vmatpush.msra.mxu0 0.0
        %1065 = vmatpush.msra.mxu0 0.0
        %1066 = vmatpush.msra.mxu0 0.0
        %1067 = vmatpush.msra.mxu0 0.0
        %1068 = vmatpush.msra.mxu0 0.0
        %1069 = vmatpush.msra.mxu0 0.0
        %1070 = vmatpush.msra.mxu0 %v1033
        %1071 = vmatmul.f32.gmra.mxu0 %v1027
        %v1072 = vpop.f32.mrf.mxu0
        %v1073 = vadd.f32 0.0, %v1072
        %1074 = vdwg.mxu0
        %v1075 = vadd.f32 %v1006, %v1053
        %v1076 = vadd.f32 %v1007, %v1073
        %s1077 = scalar_lea.vmem %s2, 16
        %v1078 = vld [vmem:[%s1077] sm:$0xf]
        %v1080 = vsel %vm270, %v1078, 0
        %v1083 = vsel %vm274, %v820, 0
        %v1086 = vsel %vm274, %v821, 0
        %1088 = vmatpush.msra.mxu0 0.0
        %1089 = vmatpush.msra.mxu0 0.0
        %1090 = vmatpush.msra.mxu0 0.0
        %1091 = vmatpush.msra.mxu0 0.0
        %1092 = vmatpush.msra.mxu0 0.0
        %1093 = vmatpush.msra.mxu0 0.0
        %1094 = vmatpush.msra.mxu0 0.0
        %1095 = vmatpush.msra.mxu0 0.0
        %1096 = vmatpush.msra.mxu0 0.0
        %1097 = vmatpush.msra.mxu0 0.0
        %1098 = vmatpush.msra.mxu0 0.0
        %1099 = vmatpush.msra.mxu0 0.0
        %1100 = vmatpush.msra.mxu0 0.0
        %1101 = vmatpush.msra.mxu0 0.0
        %1102 = vmatpush.msra.mxu0 0.0
        %1103 = vmatpush.msra.mxu0 %v1083
        %1104 = vmatmul.f32.gmra.mxu0 %v1080
        %v1105 = vpop.f32.mrf.mxu0
        %v1106 = vadd.f32 0.0, %v1105
        %1107 = vdwg.mxu0
        %1108 = vmatpush.msra.mxu0 0.0
        %1109 = vmatpush.msra.mxu0 0.0
        %1110 = vmatpush.msra.mxu0 0.0
        %1111 = vmatpush.msra.mxu0 0.0
        %1112 = vmatpush.msra.mxu0 0.0
        %1113 = vmatpush.msra.mxu0 0.0
        %1114 = vmatpush.msra.mxu0 0.0
        %1115 = vmatpush.msra.mxu0 0.0
        %1116 = vmatpush.msra.mxu0 0.0
        %1117 = vmatpush.msra.mxu0 0.0
        %1118 = vmatpush.msra.mxu0 0.0
        %1119 = vmatpush.msra.mxu0 0.0
        %1120 = vmatpush.msra.mxu0 0.0
        %1121 = vmatpush.msra.mxu0 0.0
        %1122 = vmatpush.msra.mxu0 0.0
        %1123 = vmatpush.msra.mxu0 %v1086
        %1124 = vmatmul.f32.gmra.mxu0 %v1080
        %v1125 = vpop.f32.mrf.mxu0
        %v1126 = vadd.f32 0.0, %v1125
        %1127 = vdwg.mxu0
        %v1128 = vadd.f32 %v1075, %v1106
        %v1129 = vadd.f32 %v1076, %v1126
        %s1130 = scalar_lea.vmem %s2, 20
        %v1131 = vld [vmem:[%s1130] sm:$0xf]
        %v1133 = vsel %vm270, %v1131, 0
        %v1136 = vsel %vm274, %v1022, 0
        %v1139 = vsel %vm274, %v1023, 0
        %1141 = vmatpush.msra.mxu0 0.0
        %1142 = vmatpush.msra.mxu0 0.0
        %1143 = vmatpush.msra.mxu0 0.0
        %1144 = vmatpush.msra.mxu0 0.0
        %1145 = vmatpush.msra.mxu0 0.0
        %1146 = vmatpush.msra.mxu0 0.0
        %1147 = vmatpush.msra.mxu0 0.0
        %1148 = vmatpush.msra.mxu0 0.0
        %1149 = vmatpush.msra.mxu0 0.0
        %1150 = vmatpush.msra.mxu0 0.0
        %1151 = vmatpush.msra.mxu0 0.0
        %1152 = vmatpush.msra.mxu0 0.0
        %1153 = vmatpush.msra.mxu0 0.0
        %1154 = vmatpush.msra.mxu0 0.0
        %1155 = vmatpush.msra.mxu0 0.0
        %1156 = vmatpush.msra.mxu0 %v1136
        %1157 = vmatmul.f32.gmra.mxu0 %v1133
        %v1158 = vpop.f32.mrf.mxu0
        %v1159 = vadd.f32 0.0, %v1158
        %1160 = vdwg.mxu0
        %1161 = vmatpush.msra.mxu0 0.0
        %1162 = vmatpush.msra.mxu0 0.0
        %1163 = vmatpush.msra.mxu0 0.0
        %1164 = vmatpush.msra.mxu0 0.0
        %1165 = vmatpush.msra.mxu0 0.0
        %1166 = vmatpush.msra.mxu0 0.0
        %1167 = vmatpush.msra.mxu0 0.0
        %1168 = vmatpush.msra.mxu0 0.0
        %1169 = vmatpush.msra.mxu0 0.0
        %1170 = vmatpush.msra.mxu0 0.0
        %1171 = vmatpush.msra.mxu0 0.0
        %1172 = vmatpush.msra.mxu0 0.0
        %1173 = vmatpush.msra.mxu0 0.0
        %1174 = vmatpush.msra.mxu0 0.0
        %1175 = vmatpush.msra.mxu0 0.0
        %1176 = vmatpush.msra.mxu0 %v1139
        %1177 = vmatmul.f32.gmra.mxu0 %v1133
        %v1178 = vpop.f32.mrf.mxu0
        %v1179 = vadd.f32 0.0, %v1178
        %1180 = vdwg.mxu0
        %v1181 = vadd.f32 %v1128, %v1159
        %v1182 = vadd.f32 %v1129, %v1179
        %1183 = vrot.lane.b32.xlu0 %v836, 1
        %v1184 = vpop.permute.xlu0 %1183
        %1185 = vrot.lane.b32.xlu0 %v837, 1
        %v1186 = vpop.permute.xlu0 %1185
        %v1187 = vsel %vm245, %v1184, %v1186
        %v1188 = vsel %vm245, %v1186, %v1184
        %1189 = vrot.lane.b32.xlu0 %v836, 127
        %v1190 = vpop.permute.xlu0 %1189
        %1191 = vrot.lane.b32.xlu0 %v837, 127
        %v1192 = vpop.permute.xlu0 %1191
        %v1193 = vsel %vm252, %v1190, %v1192
        %v1194 = vsel %vm252, %v1192, %v1190
        %v1195 = vsel %vm257, %v1193, %v1188
        %v1196 = vsel %vm258, %v1194, %v1187
        %v1197 = vsel %vm263, %v1188, %v1193
        %v1198 = vsel %vm264, %v1187, %v1194
        %s1199 = scalar_lea.vmem %s2, 24
        %v1200 = vld [vmem:[%s1199] sm:$0xf]
        %v1202 = vsel %vm270, %v1200, 0
        %v1205 = vsel %vm274, %v1195, 0
        %v1208 = vsel %vm274, %v1196, 0
        %1210 = vmatpush.msra.mxu0 0.0
        %1211 = vmatpush.msra.mxu0 0.0
        %1212 = vmatpush.msra.mxu0 0.0
        %1213 = vmatpush.msra.mxu0 0.0
        %1214 = vmatpush.msra.mxu0 0.0
        %1215 = vmatpush.msra.mxu0 0.0
        %1216 = vmatpush.msra.mxu0 0.0
        %1217 = vmatpush.msra.mxu0 0.0
        %1218 = vmatpush.msra.mxu0 0.0
        %1219 = vmatpush.msra.mxu0 0.0
        %1220 = vmatpush.msra.mxu0 0.0
        %1221 = vmatpush.msra.mxu0 0.0
        %1222 = vmatpush.msra.mxu0 0.0
        %1223 = vmatpush.msra.mxu0 0.0
        %1224 = vmatpush.msra.mxu0 0.0
        %1225 = vmatpush.msra.mxu0 %v1205
        %1226 = vmatmul.f32.gmra.mxu0 %v1202
        %v1227 = vpop.f32.mrf.mxu0
        %v1228 = vadd.f32 0.0, %v1227
        %1229 = vdwg.mxu0
        %1230 = vmatpush.msra.mxu0 0.0
        %1231 = vmatpush.msra.mxu0 0.0
        %1232 = vmatpush.msra.mxu0 0.0
        %1233 = vmatpush.msra.mxu0 0.0
        %1234 = vmatpush.msra.mxu0 0.0
        %1235 = vmatpush.msra.mxu0 0.0
        %1236 = vmatpush.msra.mxu0 0.0
        %1237 = vmatpush.msra.mxu0 0.0
        %1238 = vmatpush.msra.mxu0 0.0
        %1239 = vmatpush.msra.mxu0 0.0
        %1240 = vmatpush.msra.mxu0 0.0
        %1241 = vmatpush.msra.mxu0 0.0
        %1242 = vmatpush.msra.mxu0 0.0
        %1243 = vmatpush.msra.mxu0 0.0
        %1244 = vmatpush.msra.mxu0 0.0
        %1245 = vmatpush.msra.mxu0 %v1208
        %1246 = vmatmul.f32.gmra.mxu0 %v1202
        %v1247 = vpop.f32.mrf.mxu0
        %v1248 = vadd.f32 0.0, %v1247
        %1249 = vdwg.mxu0
        %v1250 = vadd.f32 %v1181, %v1228
        %v1251 = vadd.f32 %v1182, %v1248
        %s1252 = scalar_lea.vmem %s2, 28
        %v1253 = vld [vmem:[%s1252] sm:$0xf]
        %v1255 = vsel %vm270, %v1253, 0
        %v1258 = vsel %vm274, %v836, 0
        %v1261 = vsel %vm274, %v837, 0
        %1263 = vmatpush.msra.mxu0 0.0
        %1264 = vmatpush.msra.mxu0 0.0
        %1265 = vmatpush.msra.mxu0 0.0
        %1266 = vmatpush.msra.mxu0 0.0
        %1267 = vmatpush.msra.mxu0 0.0
        %1268 = vmatpush.msra.mxu0 0.0
        %1269 = vmatpush.msra.mxu0 0.0
        %1270 = vmatpush.msra.mxu0 0.0
        %1271 = vmatpush.msra.mxu0 0.0
        %1272 = vmatpush.msra.mxu0 0.0
        %1273 = vmatpush.msra.mxu0 0.0
        %1274 = vmatpush.msra.mxu0 0.0
        %1275 = vmatpush.msra.mxu0 0.0
        %1276 = vmatpush.msra.mxu0 0.0
        %1277 = vmatpush.msra.mxu0 0.0
        %1278 = vmatpush.msra.mxu0 %v1258
        %1279 = vmatmul.f32.gmra.mxu0 %v1255
        %v1280 = vpop.f32.mrf.mxu0
        %v1281 = vadd.f32 0.0, %v1280
        %1282 = vdwg.mxu0
        %1283 = vmatpush.msra.mxu0 0.0
        %1284 = vmatpush.msra.mxu0 0.0
        %1285 = vmatpush.msra.mxu0 0.0
        %1286 = vmatpush.msra.mxu0 0.0
        %1287 = vmatpush.msra.mxu0 0.0
        %1288 = vmatpush.msra.mxu0 0.0
        %1289 = vmatpush.msra.mxu0 0.0
        %1290 = vmatpush.msra.mxu0 0.0
        %1291 = vmatpush.msra.mxu0 0.0
        %1292 = vmatpush.msra.mxu0 0.0
        %1293 = vmatpush.msra.mxu0 0.0
        %1294 = vmatpush.msra.mxu0 0.0
        %1295 = vmatpush.msra.mxu0 0.0
        %1296 = vmatpush.msra.mxu0 0.0
        %1297 = vmatpush.msra.mxu0 0.0
        %1298 = vmatpush.msra.mxu0 %v1261
        %1299 = vmatmul.f32.gmra.mxu0 %v1255
        %v1300 = vpop.f32.mrf.mxu0
        %v1301 = vadd.f32 0.0, %v1300
        %1302 = vdwg.mxu0
        %v1303 = vadd.f32 %v1250, %v1281
        %v1304 = vadd.f32 %v1251, %v1301
        %s1305 = scalar_lea.vmem %s2, 32
        %v1306 = vld [vmem:[%s1305] sm:$0xf]
        %v1308 = vsel %vm270, %v1306, 0
        %v1311 = vsel %vm274, %v1197, 0
        %v1314 = vsel %vm274, %v1198, 0
        %1316 = vmatpush.msra.mxu0 0.0
        %1317 = vmatpush.msra.mxu0 0.0
        %1318 = vmatpush.msra.mxu0 0.0
        %1319 = vmatpush.msra.mxu0 0.0
        %1320 = vmatpush.msra.mxu0 0.0
        %1321 = vmatpush.msra.mxu0 0.0
        %1322 = vmatpush.msra.mxu0 0.0
        %1323 = vmatpush.msra.mxu0 0.0
        %1324 = vmatpush.msra.mxu0 0.0
        %1325 = vmatpush.msra.mxu0 0.0
        %1326 = vmatpush.msra.mxu0 0.0
        %1327 = vmatpush.msra.mxu0 0.0
        %1328 = vmatpush.msra.mxu0 0.0
        %1329 = vmatpush.msra.mxu0 0.0
        %1330 = vmatpush.msra.mxu0 0.0
        %1331 = vmatpush.msra.mxu0 %v1311
        %1332 = vmatmul.f32.gmra.mxu0 %v1308
        %v1333 = vpop.f32.mrf.mxu0
        %v1334 = vadd.f32 0.0, %v1333
        %1335 = vdwg.mxu0
        %1336 = vmatpush.msra.mxu0 0.0
        %1337 = vmatpush.msra.mxu0 0.0
        %1338 = vmatpush.msra.mxu0 0.0
        %1339 = vmatpush.msra.mxu0 0.0
        %1340 = vmatpush.msra.mxu0 0.0
        %1341 = vmatpush.msra.mxu0 0.0
        %1342 = vmatpush.msra.mxu0 0.0
        %1343 = vmatpush.msra.mxu0 0.0
        %1344 = vmatpush.msra.mxu0 0.0
        %1345 = vmatpush.msra.mxu0 0.0
        %1346 = vmatpush.msra.mxu0 0.0
        %1347 = vmatpush.msra.mxu0 0.0
        %1348 = vmatpush.msra.mxu0 0.0
        %1349 = vmatpush.msra.mxu0 0.0
        %1350 = vmatpush.msra.mxu0 0.0
        %1351 = vmatpush.msra.mxu0 %v1314
        %1352 = vmatmul.f32.gmra.mxu0 %v1308
        %v1353 = vpop.f32.mrf.mxu0
        %v1354 = vadd.f32 0.0, %v1353
        %1355 = vdwg.mxu0
        %v1356 = vadd.f32 %v1303, %v1334
        %v1357 = vadd.f32 %v1304, %v1354
        %v1358 = vsel %vm274, %v1356, 0.0
        %v1359 = vsel %vm274, %v1357, 0.0
        %v1360 = vadd.f32 %v1358, %v1359
        %1361 = vadd.xlane.f32.xlu0 %v1360
        %v1362 = vpop.xlane.xlu0 %1361
        %v1363 = vmul.f32 %v1362, %v795
        %v1364 = vsub.f32 %v1356, %v1363
        %v1365 = vsub.f32 %v1357, %v1363
        %v1366 = vmul.f32 %v1364, %v1364
        %v1367 = vmul.f32 %v1365, %v1365
        %v1368 = vsel %vm274, %v1366, 0.0
        %v1369 = vsel %vm274, %v1367, 0.0
        %v1370 = vadd.f32 %v1368, %v1369
        %1371 = vadd.xlane.f32.xlu0 %v1370
        %v1372 = vpop.xlane.xlu0 %1371
        %v1373 = vmul.f32 %v1372, %v795
        %v1374 = vadd.f32 %v1373, 1e-05
        %v1375 = vrsqrt.pop %v1374
        %v1376 = vmul.f32 %v1375, %v1374
        %v1377 = vmul.f32 %v1376, %v1375
        %v1378 = vmul.f32 0.5, %v1377
        %v1379 = vsub.f32 1.5, %v1378
        %v1380 = vmul.f32 %v1375, %v1379
        %vm1381 = vweird.f32 %v1374
        %vm1382 = vweird.f32 %v1375
        %vm1383 = vmor %vm1381, %vm1382
        %v1384 = vsel %vm1383, %v1375, %v1380
        %v1385 = vmul.f32 %v1364, %v1384
        %v1386 = vmul.f32 %v1365, %v1384
        %v1389 = vrot.slane %v1386, 4
        %v1390 = vsel %vm274, %v1385, %v1389
        %v1392 = vadd.f32 %v204, %v1390
        %1393 = vst [vmem:[%s163] sm:$0xff] %v1392
        %s1394 = sand.u32 %s93, 1
        %s1395 = scalar_lea.sflag [#allocation3], %s1394
        %s1396 = sand.u32 %s93, 1
        %s1397 = smul.addr %s1396, 8
        %s1398 = scalar_lea.vmem [#allocation2], %s1397
        // Predicated region
        $region33: #{tpu_custom_call.1} parent=31 // pred_check
          %p1399 = pneg %p103
        $region34: #{tpu_custom_call.1} parent=31 // pred_check_branch
          %1401 = sbr.rel (%p1399) target = $region36
        $region35: #{tpu_custom_call.1} parent=31 // pred_region
          %1403 = vsyncadd %s1395, 0
          %s1404 = smul.addr %s17, 2
          %s1405 = smul.addr %s1404, 4
          %s1406 = scalar_lea.hbm %s3, %s1405
          %s1408 = sshll.u32 %s1398, 4
          %s1409 = int_to_ptr.vmem [resolvable:$true] %s1408
          %s1410 = sshll.u32 %s1406, 4
          %s1411 = int_to_ptr.hbm [resolvable:$true] %s1410
          %1413 = dma.vmem_to_hbm [thread:$0]  %s1409, 128, %s1411, %s1395
        $region36: #{tpu_custom_call.1} parent=31 // pred_fallthru
          _
      $region32: #{tpu_custom_call.1} parent=5 // pred_fallthru
        _
      %p1414 = scmp.le.s32.totalorder 2, %s12
      // Predicated region
      $region37: #{tpu_custom_call.1} parent=5 // pred_check
        %p1415 = pneg %p1414
      $region38: #{tpu_custom_call.1} parent=5 // pred_check_branch
        %1417 = sbr.rel (%p1415) target = $region40
      $region39: #{tpu_custom_call.1} parent=5 // pred_region
        %s1418 = ssub.s32 %s12, 2
        // Predicated region
        $region41: #{tpu_custom_call.1} parent=39 // pred_check
          %p1419 = pneg %p109
        $region42: #{tpu_custom_call.1} parent=39 // pred_check_branch
          %1421 = sbr.rel (%p1419) target = $region44
        $region43: #{tpu_custom_call.1} parent=39 // pred_region
          %s1422 = sand.u32 %s94, 1
          %s1423 = scalar_lea.sflag [#allocation3], %s1422
          %s1424 = sand.u32 %s94, 1
          %s1425 = smul.addr %s1424, 8
          %s1426 = scalar_lea.vmem [#allocation2], %s1425
          %1428 = dma.done %s1423, 128
        $region44: #{tpu_custom_call.1} parent=39 // pred_fallthru
          _
      $region40: #{tpu_custom_call.1} parent=5 // pred_fallthru
        _
    $region6: #{tpu_custom_call.1} parent=1 // loop_footer
      %s16 = sadd.s32 1, %s12
    $region7: #{tpu_custom_call.1} parent=1 // loop_footer_branch
      %11 = sbr.rel target = $region3
    $region8: #{tpu_custom_call.1} parent=1 // loop_exit
      _
    %1429 = vsyncpa [#allocation3], 1
    %s1430 = scalar_lea.sflag [#allocation3], 1
    %1431 = vsyncpa %s1430, 1

</llo_original>
